<compile_context>
chip_gen: v6e
topology: v6e:2x2x1
jax: 0.10.0
libtpu: 0.0.40
codegen_flags: <defaults>
</compile_context>

<pallas_src>
import functools

import jax
import jax.numpy as jnp
from jax import lax
from jax.experimental import pallas as pl
from jax.experimental.pallas import tpu as pltpu

PAD = 128      # lane-aligned feature width for all padded blocks
B_ROWS = 8     # sublane-aligned row block holding the bias


def _kernel_net_kernel(p_ref, x_ref, y_ref, reg_ref, *,
                       layer_dims, lambda_s, lambda_2):
    """Fused forward for the whole KernelNet.

    p_ref  : (R, 128) packed parameter slab (layout produced by pack_params)
    x_ref  : (M, 128) zero-padded input
    y_ref  : (M, 128) padded output (lane-dense VMEM store)
    reg_ref: (1,) SMEM scalar -- summed regularization term
    """
    h = x_ref[...]                       # activations stay on-chip across layers
    total_reg = jnp.float32(0.0)

    num_layers = len(layer_dims)
    row = 0
    for l, (n_in, n_out) in enumerate(layer_dims):       # static, unrolled
        w     = p_ref[row:row + PAD, :];    row += PAD   # (128,128) zero-padded W
        u_aug = p_ref[row:row + PAD, :];    row += PAD   # [u, |u|^2, 1] (+ sentinels)
        v_aug = p_ref[row:row + PAD, :];    row += PAD   # [-2v, 1, |v|^2] (+ sentinels)
        b_blk = p_ref[row:row + B_ROWS, :]; row += B_ROWS

        # dist^2_ij = |u_i|^2 + |v_j|^2 - 2 u_i.v_j  in ONE MXU pass
        # (K = n_dim + 2 augmented columns, remaining K lanes are zero).
        dist2 = lax.dot_general(u_aug, v_aug, (((1,), (1,)), ((), ())),
                                preferred_element_type=jnp.float32)
        w_hat = jnp.maximum(1.0 - dist2, 0.0)            # == 0 in all padded regions

        # mse(., zeros) == mean of squares over the REAL (n_in, n_out) extent.
        # Padded entries of w_hat and W are exactly zero, so sum / count is exact.
        inv_cnt = 1.0 / float(n_in * n_out)
        total_reg = (total_reg
                     + lambda_s * jnp.sum(w_hat * w_hat) * inv_cnt
                     + lambda_2 * jnp.sum(w * w) * inv_cnt)

        w_eff = w * w_hat                                # zero outside real extent
        h = jnp.dot(h, w_eff, preferred_element_type=jnp.float32) + b_blk[0:1, :]
        if l < num_layers - 1:                           # last layer: Identity
            h = jax.nn.sigmoid(h)
        # TODO(synk): nn.Dropout(0.5) between layers is inference-mode identity here.

    y_ref[...] = h                                       # lane-dense, unmasked store
    reg_ref[0] = total_reg                               # single SMEM scalar writeback


def pack_params(params):
    """Pack all layer params into one lane-aligned (R, 128) f32 slab.

    Per layer the slab holds, stacked along rows:
      W_pad   (128, 128): W zero-padded to (128, 128)
      u_aug   (128, 128): rows [u, |u|^2, 1]; padded rows [0.., 2, 1] (=> w_hat 0)
      v_aug   (128, 128): rows [-2v, 1, |v|^2]; padded rows [0.., 1, 2] (=> w_hat 0)
      b_pad   (  8, 128): bias in row 0, zero-padded
    """
    blocks, layer_dims = [], []
    for p in params:
        W, u, v, b = p["W"], p["u"], p["v"], p["b"]
        n_in, n_out = W.shape
        n_dim = u.shape[1]
        layer_dims.append((n_in, n_out))

        Wp = jnp.zeros((PAD, PAD), jnp.float32).at[:n_in, :n_out].set(W)

        u_sq = jnp.sum(u * u, axis=1, keepdims=True)
        u_aug = jnp.concatenate([u, u_sq, jnp.ones((n_in, 1), jnp.float32)], axis=1)
        Up = jnp.zeros((PAD, PAD), jnp.float32)
        Up = Up.at[:n_in, :n_dim + 2].set(u_aug)
        Up = Up.at[n_in:, n_dim].set(2.0)      # sentinel: dist^2 >= 2 in padded rows
        Up = Up.at[n_in:, n_dim + 1].set(1.0)

        v_sq = jnp.sum(v * v, axis=1, keepdims=True)
        v_aug = jnp.concatenate([-2.0 * v, jnp.ones((n_out, 1), jnp.float32), v_sq],
                                axis=1)
        Vp = jnp.zeros((PAD, PAD), jnp.float32)
        Vp = Vp.at[:n_out, :n_dim + 2].set(v_aug)
        Vp = Vp.at[n_out:, n_dim].set(1.0)
        Vp = Vp.at[n_out:, n_dim + 1].set(2.0)  # sentinel: dist^2 >= 2 in padded cols

        Bp = jnp.zeros((B_ROWS, PAD), jnp.float32).at[0, :n_out].set(b)

        blocks += [Wp, Up, Vp, Bp]
    return jnp.concatenate(blocks, axis=0), tuple(layer_dims)


def kernel_net_forward(x, params, *, lambda_s, lambda_2):
    """Run the whole KernelNet (all layers) in one fused pallas_call."""
    M, n_u = x.shape
    slab, layer_dims = pack_params(params)
    x_pad = jnp.zeros((M, PAD), jnp.float32).at[:, :n_u].set(x.astype(jnp.float32))

    kern = functools.partial(_kernel_net_kernel,
                             layer_dims=layer_dims,
                             lambda_s=float(lambda_s),
                             lambda_2=float(lambda_2))

    # Everything fits easily in VMEM -> single grid-free invocation, whole-array
    # blocks.  (On v7x with large M, add a "parallel" batch grid here.)
    y_pad, reg = pl.pallas_call(
        kern,
        out_shape=(jax.ShapeDtypeStruct((M, PAD), jnp.float32),
                   jax.ShapeDtypeStruct((1,), jnp.float32)),
        in_specs=[pl.BlockSpec(memory_space=pltpu.MemorySpace.VMEM),
                  pl.BlockSpec(memory_space=pltpu.MemorySpace.VMEM)],
        out_specs=(pl.BlockSpec(memory_space=pltpu.MemorySpace.VMEM),
                   pl.BlockSpec(memory_space=pltpu.MemorySpace.SMEM)),
    )(slab, x_pad)

    n_out_final = params[-1]["W"].shape[1]
    return y_pad[:, :n_out_final], reg[0]


def _xavier_uniform(key, shape, gain):
    fan_in, fan_out = shape[0], shape[1]
    limit = gain * jnp.sqrt(6.0 / (fan_in + fan_out))
    return jax.random.uniform(key, shape, jnp.float32, -limit, limit)


def init_kernel_net(key, n_u, n_hid, n_dim, n_layers):
    """Deterministic parameters mirroring KernelNet.__init__ shapes."""
    gain = jnp.sqrt(2.0)  # torch gain for 'relu'
    dims = []
    for i in range(n_layers):
        n_in = n_u if i == 0 else n_hid
        dims.append((n_in, n_hid))
    dims.append((n_hid, n_u))  # final identity-activation layer

    params = []
    for (n_in, n_out) in dims:
        key, k_w, k_u, k_v = jax.random.split(key, 4)
        W = _xavier_uniform(k_w, (n_in, n_out), gain)
        # torch params are (n_in, 1, n_dim) / (1, n_out, n_dim); store squeezed.
        u = _xavier_uniform(k_u, (n_in, n_dim), gain)
        v = _xavier_uniform(k_v, (n_out, n_dim), gain)
        b = jnp.zeros((n_out,), jnp.float32)
        params.append({"W": W, "u": u, "v": v, "b": b})
    return params


if __name__ == "__main__":
    # Small shapes consistent with the module: n_u = input/output width,
    # n_hid = hidden width, n_dim = kernel embedding dim.
    n_u, n_hid, n_dim, n_layers = 32, 32, 4, 2
    lambda_s, lambda_2 = 0.006, 20.0
    M = 16  # number of rows in x

    key = jax.random.PRNGKey(0)
    key, k_x = jax.random.split(key)
    x = jax.random.normal(k_x, (M, n_u), jnp.float32)

    params = init_kernel_net(key, n_u, n_hid, n_dim, n_layers)

    y, total_reg = kernel_net_forward(x, params, lambda_s=lambda_s, lambda_2=lambda_2)
    jax.block_until_ready((y, total_reg))

    assert y.shape == (M, n_u)
    assert total_reg.shape == ()
    print("KERNEL_OK")
</pallas_src>

<mosaic_0001>
module attributes {stable_mosaic.version = 11 : i64} {
  func.func @_kernel_net_kernel(%arg0: memref<1176x128xf32, #tpu.memory_space<vmem>>, %arg1: memref<16x128xf32, #tpu.memory_space<vmem>>, %arg2: memref<16x128xf32, #tpu.memory_space<vmem>>, %arg3: memref<1xf32, #tpu.memory_space<smem>>) attributes {dimension_semantics = [], scalar_prefetch = 0 : i64, scratch_operands = 0 : i64, tpu.core_type = #tpu.core_type<tc>} {
    %c0 = arith.constant 0 : index
    %c0_0 = arith.constant 0 : index
    %0 = vector.load %arg1[%c0, %c0_0] : memref<16x128xf32, #tpu.memory_space<vmem>>, vector<16x128xf32>
    %c0_1 = arith.constant 0 : index
    %c0_2 = arith.constant 0 : index
    %1 = vector.load %arg0[%c0_1, %c0_2] : memref<1176x128xf32, #tpu.memory_space<vmem>>, vector<128x128xf32>
    %c128 = arith.constant 128 : index
    %c0_3 = arith.constant 0 : index
    %2 = vector.load %arg0[%c128, %c0_3] : memref<1176x128xf32, #tpu.memory_space<vmem>>, vector<128x128xf32>
    %c256 = arith.constant 256 : index
    %c0_4 = arith.constant 0 : index
    %3 = vector.load %arg0[%c256, %c0_4] : memref<1176x128xf32, #tpu.memory_space<vmem>>, vector<128x128xf32>
    %c384 = arith.constant 384 : index
    %c0_5 = arith.constant 0 : index
    %4 = vector.load %arg0[%c384, %c0_5] : memref<1176x128xf32, #tpu.memory_space<vmem>>, vector<8x128xf32>
    %cst = arith.constant dense<0.000000e+00> : vector<128x128xf32>
    %5 = tpu.matmul %2, %3, %cst {dimension_numbers = #tpu.dot_dimension_numbers<[1], [1], [0], [0], [0, 0, 1, 0], [], []>} : vector<128x128xf32>, vector<128x128xf32>, vector<128x128xf32> -> vector<128x128xf32>
    %cst_6 = arith.constant 1.000000e+00 : f32
    %6 = vector.broadcast %cst_6 : f32 to vector<128x128xf32>
    %7 = arith.subf %6, %5 : vector<128x128xf32>
    %cst_7 = arith.constant 0.000000e+00 : f32
    %8 = vector.broadcast %cst_7 : f32 to vector<128x128xf32>
    %9 = arith.maximumf %7, %8 : vector<128x128xf32>
    %10 = arith.mulf %9, %9 : vector<128x128xf32>
    %11 = vector.shape_cast %10 : vector<128x128xf32> to vector<1x128x128xf32>
    %cst_8 = arith.constant dense<0.000000e+00> : vector<1xf32>
    %12 = vector.multi_reduction <add>, %11, %cst_8 [1, 2] : vector<1x128x128xf32> to vector<1xf32>
    %13 = vector.shape_cast %12 : vector<1xf32> to vector<1x1x1xf32>
    %14 = vector.extract %13[0, 0, 0] : f32 from vector<1x1x1xf32>
    %cst_9 = arith.constant 6.000000e-03 : f32
    %15 = arith.mulf %cst_9, %14 : f32
    %cst_10 = arith.constant 9.765625E-4 : f32
    %16 = arith.mulf %15, %cst_10 : f32
    %cst_11 = arith.constant 0.000000e+00 : f32
    %17 = arith.addf %cst_11, %16 : f32
    %18 = arith.mulf %1, %1 : vector<128x128xf32>
    %19 = vector.shape_cast %18 : vector<128x128xf32> to vector<1x128x128xf32>
    %cst_12 = arith.constant dense<0.000000e+00> : vector<1xf32>
    %20 = vector.multi_reduction <add>, %19, %cst_12 [1, 2] : vector<1x128x128xf32> to vector<1xf32>
    %21 = vector.shape_cast %20 : vector<1xf32> to vector<1x1x1xf32>
    %22 = vector.extract %21[0, 0, 0] : f32 from vector<1x1x1xf32>
    %cst_13 = arith.constant 2.000000e+01 : f32
    %23 = arith.mulf %cst_13, %22 : f32
    %cst_14 = arith.constant 9.765625E-4 : f32
    %24 = arith.mulf %23, %cst_14 : f32
    %25 = arith.addf %17, %24 : f32
    %26 = arith.mulf %1, %9 : vector<128x128xf32>
    %cst_15 = arith.constant dense<0.000000e+00> : vector<16x128xf32>
    %27 = tpu.matmul %0, %26, %cst_15 {dimension_numbers = #tpu.dot_dimension_numbers<[1], [0], [0], [1], [0, 0, 1, 1], [], []>} : vector<16x128xf32>, vector<128x128xf32>, vector<16x128xf32> -> vector<16x128xf32>
    %28 = vector.extract_strided_slice %4 {offsets = [0, 0], sizes = [1, 128], strides = [1, 1]} : vector<8x128xf32> to vector<1x128xf32>
    %29 = vector.broadcast %28 : vector<1x128xf32> to vector<16x128xf32>
    %30 = arith.addf %27, %29 : vector<16x128xf32>
    %31 = arith.negf %30 : vector<16x128xf32>
    %32 = math.exp %31 : vector<16x128xf32>
    %cst_16 = arith.constant 1.000000e+00 : f32
    %33 = vector.broadcast %cst_16 : f32 to vector<16x128xf32>
    %34 = arith.addf %33, %32 : vector<16x128xf32>
    %35 = arith.divf %33, %34 : vector<16x128xf32>
    %c392 = arith.constant 392 : index
    %c0_17 = arith.constant 0 : index
    %36 = vector.load %arg0[%c392, %c0_17] : memref<1176x128xf32, #tpu.memory_space<vmem>>, vector<128x128xf32>
    %c520 = arith.constant 520 : index
    %c0_18 = arith.constant 0 : index
    %37 = vector.load %arg0[%c520, %c0_18] : memref<1176x128xf32, #tpu.memory_space<vmem>>, vector<128x128xf32>
    %c648 = arith.constant 648 : index
    %c0_19 = arith.constant 0 : index
    %38 = vector.load %arg0[%c648, %c0_19] : memref<1176x128xf32, #tpu.memory_space<vmem>>, vector<128x128xf32>
    %c776 = arith.constant 776 : index
    %c0_20 = arith.constant 0 : index
    %39 = vector.load %arg0[%c776, %c0_20] : memref<1176x128xf32, #tpu.memory_space<vmem>>, vector<8x128xf32>
    %cst_21 = arith.constant dense<0.000000e+00> : vector<128x128xf32>
    %40 = tpu.matmul %37, %38, %cst_21 {dimension_numbers = #tpu.dot_dimension_numbers<[1], [1], [0], [0], [0, 0, 1, 0], [], []>} : vector<128x128xf32>, vector<128x128xf32>, vector<128x128xf32> -> vector<128x128xf32>
    %cst_22 = arith.constant 1.000000e+00 : f32
    %41 = vector.broadcast %cst_22 : f32 to vector<128x128xf32>
    %42 = arith.subf %41, %40 : vector<128x128xf32>
    %cst_23 = arith.constant 0.000000e+00 : f32
    %43 = vector.broadcast %cst_23 : f32 to vector<128x128xf32>
    %44 = arith.maximumf %42, %43 : vector<128x128xf32>
    %45 = arith.mulf %44, %44 : vector<128x128xf32>
    %46 = vector.shape_cast %45 : vector<128x128xf32> to vector<1x128x128xf32>
    %cst_24 = arith.constant dense<0.000000e+00> : vector<1xf32>
    %47 = vector.multi_reduction <add>, %46, %cst_24 [1, 2] : vector<1x128x128xf32> to vector<1xf32>
    %48 = vector.shape_cast %47 : vector<1xf32> to vector<1x1x1xf32>
    %49 = vector.extract %48[0, 0, 0] : f32 from vector<1x1x1xf32>
    %cst_25 = arith.constant 6.000000e-03 : f32
    %50 = arith.mulf %cst_25, %49 : f32
    %cst_26 = arith.constant 9.765625E-4 : f32
    %51 = arith.mulf %50, %cst_26 : f32
    %52 = arith.addf %25, %51 : f32
    %53 = arith.mulf %36, %36 : vector<128x128xf32>
    %54 = vector.shape_cast %53 : vector<128x128xf32> to vector<1x128x128xf32>
    %cst_27 = arith.constant dense<0.000000e+00> : vector<1xf32>
    %55 = vector.multi_reduction <add>, %54, %cst_27 [1, 2] : vector<1x128x128xf32> to vector<1xf32>
    %56 = vector.shape_cast %55 : vector<1xf32> to vector<1x1x1xf32>
    %57 = vector.extract %56[0, 0, 0] : f32 from vector<1x1x1xf32>
    %cst_28 = arith.constant 2.000000e+01 : f32
    %58 = arith.mulf %cst_28, %57 : f32
    %cst_29 = arith.constant 9.765625E-4 : f32
    %59 = arith.mulf %58, %cst_29 : f32
    %60 = arith.addf %52, %59 : f32
    %61 = arith.mulf %36, %44 : vector<128x128xf32>
    %cst_30 = arith.constant dense<0.000000e+00> : vector<16x128xf32>
    %62 = tpu.matmul %35, %61, %cst_30 {dimension_numbers = #tpu.dot_dimension_numbers<[1], [0], [0], [1], [0, 0, 1, 1], [], []>} : vector<16x128xf32>, vector<128x128xf32>, vector<16x128xf32> -> vector<16x128xf32>
    %63 = vector.extract_strided_slice %39 {offsets = [0, 0], sizes = [1, 128], strides = [1, 1]} : vector<8x128xf32> to vector<1x128xf32>
    %64 = vector.broadcast %63 : vector<1x128xf32> to vector<16x128xf32>
    %65 = arith.addf %62, %64 : vector<16x128xf32>
    %66 = arith.negf %65 : vector<16x128xf32>
    %67 = math.exp %66 : vector<16x128xf32>
    %cst_31 = arith.constant 1.000000e+00 : f32
    %68 = vector.broadcast %cst_31 : f32 to vector<16x128xf32>
    %69 = arith.addf %68, %67 : vector<16x128xf32>
    %70 = arith.divf %68, %69 : vector<16x128xf32>
    %c784 = arith.constant 784 : index
    %c0_32 = arith.constant 0 : index
    %71 = vector.load %arg0[%c784, %c0_32] : memref<1176x128xf32, #tpu.memory_space<vmem>>, vector<128x128xf32>
    %c912 = arith.constant 912 : index
    %c0_33 = arith.constant 0 : index
    %72 = vector.load %arg0[%c912, %c0_33] : memref<1176x128xf32, #tpu.memory_space<vmem>>, vector<128x128xf32>
    %c1040 = arith.constant 1040 : index
    %c0_34 = arith.constant 0 : index
    %73 = vector.load %arg0[%c1040, %c0_34] : memref<1176x128xf32, #tpu.memory_space<vmem>>, vector<128x128xf32>
    %c1168 = arith.constant 1168 : index
    %c0_35 = arith.constant 0 : index
    %74 = vector.load %arg0[%c1168, %c0_35] : memref<1176x128xf32, #tpu.memory_space<vmem>>, vector<8x128xf32>
    %cst_36 = arith.constant dense<0.000000e+00> : vector<128x128xf32>
    %75 = tpu.matmul %72, %73, %cst_36 {dimension_numbers = #tpu.dot_dimension_numbers<[1], [1], [0], [0], [0, 0, 1, 0], [], []>} : vector<128x128xf32>, vector<128x128xf32>, vector<128x128xf32> -> vector<128x128xf32>
    %cst_37 = arith.constant 1.000000e+00 : f32
    %76 = vector.broadcast %cst_37 : f32 to vector<128x128xf32>
    %77 = arith.subf %76, %75 : vector<128x128xf32>
    %cst_38 = arith.constant 0.000000e+00 : f32
    %78 = vector.broadcast %cst_38 : f32 to vector<128x128xf32>
    %79 = arith.maximumf %77, %78 : vector<128x128xf32>
    %80 = arith.mulf %79, %79 : vector<128x128xf32>
    %81 = vector.shape_cast %80 : vector<128x128xf32> to vector<1x128x128xf32>
    %cst_39 = arith.constant dense<0.000000e+00> : vector<1xf32>
    %82 = vector.multi_reduction <add>, %81, %cst_39 [1, 2] : vector<1x128x128xf32> to vector<1xf32>
    %83 = vector.shape_cast %82 : vector<1xf32> to vector<1x1x1xf32>
    %84 = vector.extract %83[0, 0, 0] : f32 from vector<1x1x1xf32>
    %cst_40 = arith.constant 6.000000e-03 : f32
    %85 = arith.mulf %cst_40, %84 : f32
    %cst_41 = arith.constant 9.765625E-4 : f32
    %86 = arith.mulf %85, %cst_41 : f32
    %87 = arith.addf %60, %86 : f32
    %88 = arith.mulf %71, %71 : vector<128x128xf32>
    %89 = vector.shape_cast %88 : vector<128x128xf32> to vector<1x128x128xf32>
    %cst_42 = arith.constant dense<0.000000e+00> : vector<1xf32>
    %90 = vector.multi_reduction <add>, %89, %cst_42 [1, 2] : vector<1x128x128xf32> to vector<1xf32>
    %91 = vector.shape_cast %90 : vector<1xf32> to vector<1x1x1xf32>
    %92 = vector.extract %91[0, 0, 0] : f32 from vector<1x1x1xf32>
    %cst_43 = arith.constant 2.000000e+01 : f32
    %93 = arith.mulf %cst_43, %92 : f32
    %cst_44 = arith.constant 9.765625E-4 : f32
    %94 = arith.mulf %93, %cst_44 : f32
    %95 = arith.addf %87, %94 : f32
    %96 = arith.mulf %71, %79 : vector<128x128xf32>
    %cst_45 = arith.constant dense<0.000000e+00> : vector<16x128xf32>
    %97 = tpu.matmul %70, %96, %cst_45 {dimension_numbers = #tpu.dot_dimension_numbers<[1], [0], [0], [1], [0, 0, 1, 1], [], []>} : vector<16x128xf32>, vector<128x128xf32>, vector<16x128xf32> -> vector<16x128xf32>
    %98 = vector.extract_strided_slice %74 {offsets = [0, 0], sizes = [1, 128], strides = [1, 1]} : vector<8x128xf32> to vector<1x128xf32>
    %99 = vector.broadcast %98 : vector<1x128xf32> to vector<16x128xf32>
    %100 = arith.addf %97, %99 : vector<16x128xf32>
    %c0_46 = arith.constant 0 : index
    %c0_47 = arith.constant 0 : index
    %101 = vector.load %arg2[%c0_46, %c0_47] : memref<16x128xf32, #tpu.memory_space<vmem>>, vector<16x128xf32>
    tpu.vector_store %arg2[%c0_46, %c0_47], %100 {strides = array<i32>} : memref<16x128xf32, #tpu.memory_space<vmem>>, vector<16x128xf32>,
    %c0_48 = arith.constant 0 : index
    %102 = memref.load %arg3[%c0_48] : memref<1xf32, #tpu.memory_space<smem>>
    memref.store %95, %arg3[%c0_48] : memref<1xf32, #tpu.memory_space<smem>>
    return
  }
}

</mosaic_0001>

<llo_original>
// kernel: tpu_custom_call.1
$region0: #{tpu_custom_call.1}
  #allocation0 [shape = 'u32[]', space=smem, size = 0x4, offset = 0x4, fixed_abs, tag = 'smem constant byte address 0x4 - core index']
  #allocation1 [shape = 'u32[144,128]{1,0:T(1,128)}', space=vmem, size = 0x12000, scoped, tag = 'internal scratch']
  %s0 = inlined_call_operand.hbm [shape: f32[1176,128], index: 0, kind: input, shape index: {}]
  %s1 = inlined_call_operand.hbm [shape: f32[16,128], index: 1, kind: input, shape index: {}]
  %s2 = inlined_call_operand.hbm [shape: f32[16,128], index: 2, kind: output, shape index: {0}]
  %s3 = inlined_call_operand.hbm [shape: f32[1], index: 3, kind: output, shape index: {1}]
  %4 = xla_tuple %s2, %s3
  %s5 = sld [smem:[#allocation0]]
  $region34: #{tpu_custom_call.1} parent=0
    _
  %s7 = ssub.s32 1, %s5
  %s8 = scalar_select 0, %s7, %s5
  $region1: #{tpu_custom_call.1} parent=0
    #allocation2 [shape = 'u8[602112]{0}', space=vmem, size = 0x93000, scoped, tag = 'input window, operand 0, single buffered']
    #allocation3 [shape = 's32[1]{0}', space=sflag, size = 0x4, scoped, tag = 'scoped memory for tpu_custom_call.1']
    #allocation4 [shape = 's32[1]{0}', space=sflag, size = 0x4, scoped, tag = 'scoped memory for tpu_custom_call.1']
    #allocation5 [shape = 's32[1]{0}', space=sflag, size = 0x4, scoped, tag = 'scoped memory for tpu_custom_call.1']
    #allocation6 [shape = 'u8[8192]{0}', space=vmem, size = 0x2000, scoped, tag = 'input window, operand 1, single buffered']
    #allocation7 [shape = 's32[1]{0}', space=sflag, size = 0x4, scoped, tag = 'scoped memory for tpu_custom_call.1']
    #allocation8 [shape = 'u8[8192]{0}', space=vmem, size = 0x2000, scoped, tag = 'output window, operand 0, single buffered']
    #allocation9 [shape = 'u8[512]{0}', space=smem, size = 0x200, scoped, tag = 'output window, operand 1, single buffered']
    %9 = vsyncpa [#allocation3], 0
    %10 = vsyncpa [#allocation7], 0
    %11 = vsyncpa [#allocation4], 0
    %12 = vsyncpa [#allocation5], 0
    // Predicated region
    $region2: #{tpu_custom_call.1} parent=1 // pred_check
      _
    $region3: #{tpu_custom_call.1} parent=1 // pred_check_branch
      %14 = sbr.rel (0) target = $region5
    $region4: #{tpu_custom_call.1} parent=1 // pred_region
      %s16 = ssub.s32 18816, 18816
      %17 = vsyncadd [#allocation3], %s16
      %s18 = sshll.u32 [#allocation2], 4
      %s19 = int_to_ptr.vmem [resolvable:$true] %s18
      %24 = dma.hbm_to_vmem [thread:$0]  %s0, 18816, %s19, [#allocation3], 128, 128, 8
    $region5: #{tpu_custom_call.1} parent=1 // pred_fallthru
      _
    // Predicated region
    $region6: #{tpu_custom_call.1} parent=1 // pred_check
      _
    $region7: #{tpu_custom_call.1} parent=1 // pred_check_branch
      %26 = sbr.rel (0) target = $region9
    $region8: #{tpu_custom_call.1} parent=1 // pred_region
      %s28 = ssub.s32 256, 256
      %29 = vsyncadd [#allocation7], %s28
      %s30 = sshll.u32 [#allocation6], 4
      %s31 = int_to_ptr.vmem [resolvable:$true] %s30
      %36 = dma.hbm_to_vmem [thread:$0]  %s1, 256, %s31, [#allocation7], 128, 128, 8
    $region9: #{tpu_custom_call.1} parent=1 // pred_fallthru
      _
    // Predicated region
    $region10: #{tpu_custom_call.1} parent=1 // pred_check
      _
    $region11: #{tpu_custom_call.1} parent=1 // pred_check_branch
      %38 = sbr.rel (0) target = $region13
    $region12: #{tpu_custom_call.1} parent=1 // pred_region
      %39 = dma.done [#allocation3], 18816
    $region13: #{tpu_custom_call.1} parent=1 // pred_fallthru
      _
    // Predicated region
    $region14: #{tpu_custom_call.1} parent=1 // pred_check
      _
    $region15: #{tpu_custom_call.1} parent=1 // pred_check_branch
      %41 = sbr.rel (0) target = $region17
    $region16: #{tpu_custom_call.1} parent=1 // pred_region
      %42 = dma.done [#allocation7], 256
    $region17: #{tpu_custom_call.1} parent=1 // pred_fallthru
      _
    %v43 = vld [vmem:[#allocation6] sm:$0xff]
    %v44 = vld [vmem:[#allocation6 + $0x8] sm:$0xff]
    %v45 = vld [vmem:[#allocation2] sm:$0xff]
    %v46 = vld [vmem:[#allocation2 + $0x8] sm:$0xff]
    %v47 = vld [vmem:[#allocation2 + $0x10] sm:$0xff]
    %v48 = vld [vmem:[#allocation2 + $0x18] sm:$0xff]
    %v49 = vld [vmem:[#allocation2 + $0x20] sm:$0xff]
    %v50 = vld [vmem:[#allocation2 + $0x28] sm:$0xff]
    %v51 = vld [vmem:[#allocation2 + $0x30] sm:$0xff]
    %v52 = vld [vmem:[#allocation2 + $0x38] sm:$0xff]
    %v53 = vld [vmem:[#allocation2 + $0x40] sm:$0xff]
    %v54 = vld [vmem:[#allocation2 + $0x48] sm:$0xff]
    %v55 = vld [vmem:[#allocation2 + $0x50] sm:$0xff]
    %v56 = vld [vmem:[#allocation2 + $0x58] sm:$0xff]
    %v57 = vld [vmem:[#allocation2 + $0x60] sm:$0xff]
    %v58 = vld [vmem:[#allocation2 + $0x68] sm:$0xff]
    %v59 = vld [vmem:[#allocation2 + $0x70] sm:$0xff]
    %v60 = vld [vmem:[#allocation2 + $0x78] sm:$0xff]
    %v61 = vld [vmem:[#allocation2 + $0x80] sm:$0xff]
    %v62 = vld [vmem:[#allocation2 + $0x88] sm:$0xff]
    %v63 = vld [vmem:[#allocation2 + $0x90] sm:$0xff]
    %v64 = vld [vmem:[#allocation2 + $0x98] sm:$0xff]
    %v65 = vld [vmem:[#allocation2 + $0xa0] sm:$0xff]
    %v66 = vld [vmem:[#allocation2 + $0xa8] sm:$0xff]
    %v67 = vld [vmem:[#allocation2 + $0xb0] sm:$0xff]
    %v68 = vld [vmem:[#allocation2 + $0xb8] sm:$0xff]
    %v69 = vld [vmem:[#allocation2 + $0xc0] sm:$0xff]
    %v70 = vld [vmem:[#allocation2 + $0xc8] sm:$0xff]
    %v71 = vld [vmem:[#allocation2 + $0xd0] sm:$0xff]
    %v72 = vld [vmem:[#allocation2 + $0xd8] sm:$0xff]
    %v73 = vld [vmem:[#allocation2 + $0xe0] sm:$0xff]
    %v74 = vld [vmem:[#allocation2 + $0xe8] sm:$0xff]
    %v75 = vld [vmem:[#allocation2 + $0xf0] sm:$0xff]
    %v76 = vld [vmem:[#allocation2 + $0xf8] sm:$0xff]
    %v77 = vld [vmem:[#allocation2 + $0x100] sm:$0xff]
    %v78 = vld [vmem:[#allocation2 + $0x108] sm:$0xff]
    %v79 = vld [vmem:[#allocation2 + $0x110] sm:$0xff]
    %v80 = vld [vmem:[#allocation2 + $0x118] sm:$0xff]
    %v81 = vld [vmem:[#allocation2 + $0x120] sm:$0xff]
    %v82 = vld [vmem:[#allocation2 + $0x128] sm:$0xff]
    %v83 = vld [vmem:[#allocation2 + $0x130] sm:$0xff]
    %v84 = vld [vmem:[#allocation2 + $0x138] sm:$0xff]
    %v85 = vld [vmem:[#allocation2 + $0x140] sm:$0xff]
    %v86 = vld [vmem:[#allocation2 + $0x148] sm:$0xff]
    %v87 = vld [vmem:[#allocation2 + $0x150] sm:$0xff]
    %v88 = vld [vmem:[#allocation2 + $0x158] sm:$0xff]
    %v89 = vld [vmem:[#allocation2 + $0x160] sm:$0xff]
    %v90 = vld [vmem:[#allocation2 + $0x168] sm:$0xff]
    %v91 = vld [vmem:[#allocation2 + $0x170] sm:$0xff]
    %v92 = vld [vmem:[#allocation2 + $0x178] sm:$0xff]
    %v93 = vld [vmem:[#allocation2 + $0x180] sm:$0xff]
    %94 = vmatprep.subr.mxu0 0.0
    %95 = vmatpush1.xpose.msra.mxu0 %v92
    %96 = vmatprep.subr.mxu0 0.0
    %97 = vmatpush1.xpose.msra.mxu0 %v91
    %98 = vmatprep.subr.mxu0 0.0
    %99 = vmatpush1.xpose.msra.mxu0 %v90
    %100 = vmatprep.subr.mxu0 0.0
    %101 = vmatpush1.xpose.msra.mxu0 %v89
    %102 = vmatprep.subr.mxu0 0.0
    %103 = vmatpush1.xpose.msra.mxu0 %v88
    %104 = vmatprep.subr.mxu0 0.0
    %105 = vmatpush1.xpose.msra.mxu0 %v87
    %106 = vmatprep.subr.mxu0 0.0
    %107 = vmatpush1.xpose.msra.mxu0 %v86
    %108 = vmatprep.subr.mxu0 0.0
    %109 = vmatpush1.xpose.msra.mxu0 %v85
    %110 = vmatprep.subr.mxu0 0.0
    %111 = vmatpush1.xpose.msra.mxu0 %v84
    %112 = vmatprep.subr.mxu0 0.0
    %113 = vmatpush1.xpose.msra.mxu0 %v83
    %114 = vmatprep.subr.mxu0 0.0
    %115 = vmatpush1.xpose.msra.mxu0 %v82
    %116 = vmatprep.subr.mxu0 0.0
    %117 = vmatpush1.xpose.msra.mxu0 %v81
    %118 = vmatprep.subr.mxu0 0.0
    %119 = vmatpush1.xpose.msra.mxu0 %v80
    %120 = vmatprep.subr.mxu0 0.0
    %121 = vmatpush1.xpose.msra.mxu0 %v79
    %122 = vmatprep.subr.mxu0 0.0
    %123 = vmatpush1.xpose.msra.mxu0 %v78
    %124 = vmatprep.subr.mxu0 0.0
    %125 = vmatpush1.xpose.msra.mxu0 %v77
    %126 = vmatprep.subr.mxu0 0.0
    %127 = vmatpush2.xpose.msra.mxu0 0.0
    %128 = vmatprep.subr.mxu0 0.0
    %129 = vmatpush2.xpose.msra.mxu0 0.0
    %130 = vmatprep.subr.mxu0 0.0
    %131 = vmatpush2.xpose.msra.mxu0 0.0
    %132 = vmatprep.subr.mxu0 0.0
    %133 = vmatpush2.xpose.msra.mxu0 0.0
    %134 = vmatprep.subr.mxu0 0.0
    %135 = vmatpush2.xpose.msra.mxu0 0.0
    %136 = vmatprep.subr.mxu0 0.0
    %137 = vmatpush2.xpose.msra.mxu0 0.0
    %138 = vmatprep.subr.mxu0 0.0
    %139 = vmatpush2.xpose.msra.mxu0 0.0
    %140 = vmatprep.subr.mxu0 0.0
    %141 = vmatpush2.xpose.msra.mxu0 0.0
    %142 = vmatprep.subr.mxu0 0.0
    %143 = vmatpush2.xpose.msra.mxu0 0.0
    %144 = vmatprep.subr.mxu0 0.0
    %145 = vmatpush2.xpose.msra.mxu0 0.0
    %146 = vmatprep.subr.mxu0 0.0
    %147 = vmatpush2.xpose.msra.mxu0 0.0
    %148 = vmatprep.subr.mxu0 0.0
    %149 = vmatpush2.xpose.msra.mxu0 0.0
    %150 = vmatprep.subr.mxu0 0.0
    %151 = vmatpush2.xpose.msra.mxu0 0.0
    %152 = vmatprep.subr.mxu0 0.0
    %153 = vmatpush2.xpose.msra.mxu0 0.0
    %154 = vmatprep.subr.mxu0 0.0
    %155 = vmatpush2.xpose.msra.mxu0 0.0
    %156 = vmatprep.subr.mxu0 0.0
    %157 = vmatpush2.xpose.msra.mxu0 0.0
    %158 = vmatprep.mubr.f32.mxu0 0.0
    %159 = vmatmul.mubr.f32.gmra.mxu0 %v61
    %v160 = vpop.f32.mrf.mxu0
    %v161 = vadd.f32 0.0, %v160
    %v162 = vpop.f32.mrf.mxu0
    %163 = vmatprep.mubr.f32.mxu0 0.0
    %164 = vmatmul.mubr.f32.gmra.mxu0 %v62
    %v165 = vpop.f32.mrf.mxu0
    %v166 = vadd.f32 0.0, %v165
    %v167 = vpop.f32.mrf.mxu0
    %168 = vmatprep.mubr.f32.mxu0 0.0
    %169 = vmatmul.mubr.f32.gmra.mxu0 %v63
    %v170 = vpop.f32.mrf.mxu0
    %v171 = vadd.f32 0.0, %v170
    %v172 = vpop.f32.mrf.mxu0
    %173 = vmatprep.mubr.f32.mxu0 0.0
    %174 = vmatmul.mubr.f32.gmra.mxu0 %v64
    %v175 = vpop.f32.mrf.mxu0
    %v176 = vadd.f32 0.0, %v175
    %v177 = vpop.f32.mrf.mxu0
    %178 = vmatprep.mubr.f32.mxu0 0.0
    %179 = vmatmul.mubr.f32.gmra.mxu0 %v65
    %v180 = vpop.f32.mrf.mxu0
    %v181 = vadd.f32 0.0, %v180
    %v182 = vpop.f32.mrf.mxu0
    %183 = vmatprep.mubr.f32.mxu0 0.0
    %184 = vmatmul.mubr.f32.gmra.mxu0 %v66
    %v185 = vpop.f32.mrf.mxu0
    %v186 = vadd.f32 0.0, %v185
    %v187 = vpop.f32.mrf.mxu0
    %188 = vmatprep.mubr.f32.mxu0 0.0
    %189 = vmatmul.mubr.f32.gmra.mxu0 %v67
    %v190 = vpop.f32.mrf.mxu0
    %v191 = vadd.f32 0.0, %v190
    %v192 = vpop.f32.mrf.mxu0
    %193 = vmatprep.mubr.f32.mxu0 0.0
    %194 = vmatmul.mubr.f32.gmra.mxu0 %v68
    %v195 = vpop.f32.mrf.mxu0
    %v196 = vadd.f32 0.0, %v195
    %v197 = vpop.f32.mrf.mxu0
    %198 = vmatprep.mubr.f32.mxu0 0.0
    %199 = vmatmul.mubr.f32.gmra.mxu0 %v69
    %v200 = vpop.f32.mrf.mxu0
    %v201 = vadd.f32 0.0, %v200
    %v202 = vpop.f32.mrf.mxu0
    %203 = vmatprep.mubr.f32.mxu0 0.0
    %204 = vmatmul.mubr.f32.gmra.mxu0 %v70
    %v205 = vpop.f32.mrf.mxu0
    %v206 = vadd.f32 0.0, %v205
    %v207 = vpop.f32.mrf.mxu0
    %208 = vmatprep.mubr.f32.mxu0 0.0
    %209 = vmatmul.mubr.f32.gmra.mxu0 %v71
    %v210 = vpop.f32.mrf.mxu0
    %v211 = vadd.f32 0.0, %v210
    %v212 = vpop.f32.mrf.mxu0
    %213 = vmatprep.mubr.f32.mxu0 0.0
    %214 = vmatmul.mubr.f32.gmra.mxu0 %v72
    %v215 = vpop.f32.mrf.mxu0
    %v216 = vadd.f32 0.0, %v215
    %v217 = vpop.f32.mrf.mxu0
    %218 = vmatprep.mubr.f32.mxu0 0.0
    %219 = vmatmul.mubr.f32.gmra.mxu0 %v73
    %v220 = vpop.f32.mrf.mxu0
    %v221 = vadd.f32 0.0, %v220
    %v222 = vpop.f32.mrf.mxu0
    %223 = vmatprep.mubr.f32.mxu0 0.0
    %224 = vmatmul.mubr.f32.gmra.mxu0 %v74
    %v225 = vpop.f32.mrf.mxu0
    %v226 = vadd.f32 0.0, %v225
    %v227 = vpop.f32.mrf.mxu0
    %228 = vmatprep.mubr.f32.mxu0 0.0
    %229 = vmatmul.mubr.f32.gmra.mxu0 %v75
    %v230 = vpop.f32.mrf.mxu0
    %v231 = vadd.f32 0.0, %v230
    %v232 = vpop.f32.mrf.mxu0
    %233 = vmatprep.mubr.f32.mxu0 0.0
    %234 = vmatmul.mubr.f32.gmra.mxu0 %v76
    %v235 = vpop.f32.mrf.mxu0
    %v236 = vadd.f32 0.0, %v235
    %v237 = vpop.f32.mrf.mxu0
    %238 = vdwg.mxu0
    %v239 = vsub.f32 1.0, %v161
    %v240 = vsub.f32 1.0, %v166
    %v241 = vsub.f32 1.0, %v171
    %v242 = vsub.f32 1.0, %v176
    %v243 = vsub.f32 1.0, %v181
    %v244 = vsub.f32 1.0, %v186
    %v245 = vsub.f32 1.0, %v191
    %v246 = vsub.f32 1.0, %v196
    %v247 = vsub.f32 1.0, %v201
    %v248 = vsub.f32 1.0, %v206
    %v249 = vsub.f32 1.0, %v211
    %v250 = vsub.f32 1.0, %v216
    %v251 = vsub.f32 1.0, %v221
    %v252 = vsub.f32 1.0, %v226
    %v253 = vsub.f32 1.0, %v231
    %v254 = vsub.f32 1.0, %v236
    %v255 = vmax.f32 %v239, 0.0
    %v256 = vmax.f32 %v240, 0.0
    %v257 = vmax.f32 %v241, 0.0
    %v258 = vmax.f32 %v242, 0.0
    %v259 = vmax.f32 %v243, 0.0
    %v260 = vmax.f32 %v244, 0.0
    %v261 = vmax.f32 %v245, 0.0
    %v262 = vmax.f32 %v246, 0.0
    %v263 = vmax.f32 %v247, 0.0
    %v264 = vmax.f32 %v248, 0.0
    %v265 = vmax.f32 %v249, 0.0
    %v266 = vmax.f32 %v250, 0.0
    %v267 = vmax.f32 %v251, 0.0
    %v268 = vmax.f32 %v252, 0.0
    %v269 = vmax.f32 %v253, 0.0
    %v270 = vmax.f32 %v254, 0.0
    %v271 = vmul.f32 %v255, %v255
    %v272 = vmul.f32 %v256, %v256
    %v273 = vmul.f32 %v257, %v257
    %v274 = vmul.f32 %v258, %v258
    %v275 = vmul.f32 %v259, %v259
    %v276 = vmul.f32 %v260, %v260
    %v277 = vmul.f32 %v261, %v261
    %v278 = vmul.f32 %v262, %v262
    %v279 = vmul.f32 %v263, %v263
    %v280 = vmul.f32 %v264, %v264
    %v281 = vmul.f32 %v265, %v265
    %v282 = vmul.f32 %v266, %v266
    %v283 = vmul.f32 %v267, %v267
    %v284 = vmul.f32 %v268, %v268
    %v285 = vmul.f32 %v269, %v269
    %v286 = vmul.f32 %v270, %v270
    %v287 = vadd.f32 %v271, %v272
    %v288 = vadd.f32 %v287, %v273
    %v289 = vadd.f32 %v288, %v274
    %v290 = vadd.f32 %v289, %v275
    %v291 = vadd.f32 %v290, %v276
    %v292 = vadd.f32 %v291, %v277
    %v293 = vadd.f32 %v292, %v278
    %v294 = vadd.f32 %v293, %v279
    %v295 = vadd.f32 %v294, %v280
    %v296 = vadd.f32 %v295, %v281
    %v297 = vadd.f32 %v296, %v282
    %v298 = vadd.f32 %v297, %v283
    %v299 = vadd.f32 %v298, %v284
    %v300 = vadd.f32 %v299, %v285
    %v301 = vadd.f32 %v300, %v286
    %302 = vadd.xlane.f32.xlu0 %v301
    %v303 = vpop.xlane.xlu0 %302
    %v304 = vrot.slane %v303, 4
    %v305 = vadd.f32 %v303, %v304
    %v306 = vrot.slane %v305, 2
    %v307 = vadd.f32 %v305, %v306
    %v308 = vrot.slane %v307, 1
    %v309 = vadd.f32 %v307, %v308
    %s310 = vtos %v309
    %s311 = smul.f32 %s310, 0.006
    %s312 = smul.f32 %s311, 0.0009765625
    %s313 = sadd.f32 %s312, 0.0
    %v314 = vmul.f32 %v45, %v45
    %v315 = vmul.f32 %v46, %v46
    %v316 = vmul.f32 %v47, %v47
    %v317 = vmul.f32 %v48, %v48
    %v318 = vmul.f32 %v49, %v49
    %v319 = vmul.f32 %v50, %v50
    %v320 = vmul.f32 %v51, %v51
    %v321 = vmul.f32 %v52, %v52
    %v322 = vmul.f32 %v53, %v53
    %v323 = vmul.f32 %v54, %v54
    %v324 = vmul.f32 %v55, %v55
    %v325 = vmul.f32 %v56, %v56
    %v326 = vmul.f32 %v57, %v57
    %v327 = vmul.f32 %v58, %v58
    %v328 = vmul.f32 %v59, %v59
    %v329 = vmul.f32 %v60, %v60
    %v330 = vadd.f32 %v314, %v315
    %v331 = vadd.f32 %v330, %v316
    %v332 = vadd.f32 %v331, %v317
    %v333 = vadd.f32 %v332, %v318
    %v334 = vadd.f32 %v333, %v319
    %v335 = vadd.f32 %v334, %v320
    %v336 = vadd.f32 %v335, %v321
    %v337 = vadd.f32 %v336, %v322
    %v338 = vadd.f32 %v337, %v323
    %v339 = vadd.f32 %v338, %v324
    %v340 = vadd.f32 %v339, %v325
    %v341 = vadd.f32 %v340, %v326
    %v342 = vadd.f32 %v341, %v327
    %v343 = vadd.f32 %v342, %v328
    %v344 = vadd.f32 %v343, %v329
    %345 = vadd.xlane.f32.xlu0 %v344
    %v346 = vpop.xlane.xlu0 %345
    %v347 = vrot.slane %v346, 4
    %v348 = vadd.f32 %v346, %v347
    %v349 = vrot.slane %v348, 2
    %v350 = vadd.f32 %v348, %v349
    %v351 = vrot.slane %v350, 1
    %v352 = vadd.f32 %v350, %v351
    %s353 = vtos %v352
    %s354 = smul.f32 %s353, 20.0
    %s355 = smul.f32 %s354, 0.0009765625
    %s356 = sadd.f32 %s313, %s355
    %v357 = vmul.f32 %v45, %v255
    %v358 = vmul.f32 %v46, %v256
    %v359 = vmul.f32 %v47, %v257
    %v360 = vmul.f32 %v48, %v258
    %v361 = vmul.f32 %v49, %v259
    %v362 = vmul.f32 %v50, %v260
    %v363 = vmul.f32 %v51, %v261
    %v364 = vmul.f32 %v52, %v262
    %v365 = vmul.f32 %v53, %v263
    %v366 = vmul.f32 %v54, %v264
    %v367 = vmul.f32 %v55, %v265
    %v368 = vmul.f32 %v56, %v266
    %v369 = vmul.f32 %v57, %v267
    %v370 = vmul.f32 %v58, %v268
    %v371 = vmul.f32 %v59, %v269
    %v372 = vmul.f32 %v60, %v270
    %v373 = vlaneseq
    %v374 = vshrl.u32 %v373, 7
    %v375 = vsub.s32 0, %v374
    %v376 = vrot.slane %v93, %v375
    %377 = vmatprep.subr.mxu0 0.0
    %378 = vmatpush1.msra.mxu0 %v372
    %379 = vmatprep.subr.mxu0 0.0
    %380 = vmatpush1.msra.mxu0 %v371
    %381 = vmatprep.subr.mxu0 0.0
    %382 = vmatpush1.msra.mxu0 %v370
    %383 = vmatprep.subr.mxu0 0.0
    %384 = vmatpush1.msra.mxu0 %v369
    %385 = vmatprep.subr.mxu0 0.0
    %386 = vmatpush1.msra.mxu0 %v368
    %387 = vmatprep.subr.mxu0 0.0
    %388 = vmatpush1.msra.mxu0 %v367
    %389 = vmatprep.subr.mxu0 0.0
    %390 = vmatpush1.msra.mxu0 %v366
    %391 = vmatprep.subr.mxu0 0.0
    %392 = vmatpush1.msra.mxu0 %v365
    %393 = vmatprep.subr.mxu0 0.0
    %394 = vmatpush1.msra.mxu0 %v364
    %395 = vmatprep.subr.mxu0 0.0
    %396 = vmatpush1.msra.mxu0 %v363
    %397 = vmatprep.subr.mxu0 0.0
    %398 = vmatpush1.msra.mxu0 %v362
    %399 = vmatprep.subr.mxu0 0.0
    %400 = vmatpush1.msra.mxu0 %v361
    %401 = vmatprep.subr.mxu0 0.0
    %402 = vmatpush1.msra.mxu0 %v360
    %403 = vmatprep.subr.mxu0 0.0
    %404 = vmatpush1.msra.mxu0 %v359
    %405 = vmatprep.subr.mxu0 0.0
    %406 = vmatpush1.msra.mxu0 %v358
    %407 = vmatprep.subr.mxu0 0.0
    %408 = vmatpush1.msra.mxu0 %v357
    %409 = vmatprep.subr.mxu0 0.0
    %410 = vmatpush2.msra.mxu0 0.0
    %411 = vmatprep.subr.mxu0 0.0
    %412 = vmatpush2.msra.mxu0 0.0
    %413 = vmatprep.subr.mxu0 0.0
    %414 = vmatpush2.msra.mxu0 0.0
    %415 = vmatprep.subr.mxu0 0.0
    %416 = vmatpush2.msra.mxu0 0.0
    %417 = vmatprep.subr.mxu0 0.0
    %418 = vmatpush2.msra.mxu0 0.0
    %419 = vmatprep.subr.mxu0 0.0
    %420 = vmatpush2.msra.mxu0 0.0
    %421 = vmatprep.subr.mxu0 0.0
    %422 = vmatpush2.msra.mxu0 0.0
    %423 = vmatprep.subr.mxu0 0.0
    %424 = vmatpush2.msra.mxu0 0.0
    %425 = vmatprep.subr.mxu0 0.0
    %426 = vmatpush2.msra.mxu0 0.0
    %427 = vmatprep.subr.mxu0 0.0
    %428 = vmatpush2.msra.mxu0 0.0
    %429 = vmatprep.subr.mxu0 0.0
    %430 = vmatpush2.msra.mxu0 0.0
    %431 = vmatprep.subr.mxu0 0.0
    %432 = vmatpush2.msra.mxu0 0.0
    %433 = vmatprep.subr.mxu0 0.0
    %434 = vmatpush2.msra.mxu0 0.0
    %435 = vmatprep.subr.mxu0 0.0
    %436 = vmatpush2.msra.mxu0 0.0
    %437 = vmatprep.subr.mxu0 0.0
    %438 = vmatpush2.msra.mxu0 0.0
    %439 = vmatprep.subr.mxu0 0.0
    %440 = vmatpush2.msra.mxu0 0.0
    %441 = vmatprep.mubr.f32.mxu0 0.0
    %442 = vmatmul.mubr.f32.gmra.mxu0 %v43
    %v443 = vpop.f32.mrf.mxu0
    %v444 = vadd.f32 %v376, %v443
    %v445 = vpop.f32.mrf.mxu0
    %446 = vmatprep.mubr.f32.mxu0 0.0
    %447 = vmatmul.mubr.f32.gmra.mxu0 %v44
    %v448 = vpop.f32.mrf.mxu0
    %v449 = vadd.f32 %v376, %v448
    %v450 = vpop.f32.mrf.mxu0
    %451 = vdwg.mxu0
    %v452 = vxor.u32 %v444, 2147483648
    %v453 = vxor.u32 %v449, 2147483648
    %v454 = vmul.f32 %v452, 1.442695
    %v455 = vpow.pop %v454
    %v456 = vmul.f32 %v453, 1.442695
    %v457 = vpow.pop %v456
    %v458 = vadd.f32 %v455, 1.0
    %v459 = vadd.f32 %v457, 1.0
    %v460 = vrcp.pop %v458
    %v461 = vmul.f32 1.0, %v460
    %v462 = vrcp.pop %v459
    %v463 = vmul.f32 1.0, %v462
    %v464 = vld [vmem:[#allocation2 + $0x188] sm:$0xff]
    %v465 = vld [vmem:[#allocation2 + $0x190] sm:$0xff]
    %v466 = vld [vmem:[#allocation2 + $0x198] sm:$0xff]
    %v467 = vld [vmem:[#allocation2 + $0x1a0] sm:$0xff]
    %v468 = vld [vmem:[#allocation2 + $0x1a8] sm:$0xff]
    %v469 = vld [vmem:[#allocation2 + $0x1b0] sm:$0xff]
    %v470 = vld [vmem:[#allocation2 + $0x1b8] sm:$0xff]
    %v471 = vld [vmem:[#allocation2 + $0x1c0] sm:$0xff]
    %v472 = vld [vmem:[#allocation2 + $0x1c8] sm:$0xff]
    %v473 = vld [vmem:[#allocation2 + $0x1d0] sm:$0xff]
    %v474 = vld [vmem:[#allocation2 + $0x1d8] sm:$0xff]
    %v475 = vld [vmem:[#allocation2 + $0x1e0] sm:$0xff]
    %v476 = vld [vmem:[#allocation2 + $0x1e8] sm:$0xff]
    %v477 = vld [vmem:[#allocation2 + $0x1f0] sm:$0xff]
    %v478 = vld [vmem:[#allocation2 + $0x1f8] sm:$0xff]
    %v479 = vld [vmem:[#allocation2 + $0x200] sm:$0xff]
    %v480 = vld [vmem:[#allocation2 + $0x208] sm:$0xff]
    %v481 = vld [vmem:[#allocation2 + $0x210] sm:$0xff]
    %v482 = vld [vmem:[#allocation2 + $0x218] sm:$0xff]
    %v483 = vld [vmem:[#allocation2 + $0x220] sm:$0xff]
    %v484 = vld [vmem:[#allocation2 + $0x228] sm:$0xff]
    %v485 = vld [vmem:[#allocation2 + $0x230] sm:$0xff]
    %v486 = vld [vmem:[#allocation2 + $0x238] sm:$0xff]
    %v487 = vld [vmem:[#allocation2 + $0x240] sm:$0xff]
    %v488 = vld [vmem:[#allocation2 + $0x248] sm:$0xff]
    %v489 = vld [vmem:[#allocation2 + $0x250] sm:$0xff]
    %v490 = vld [vmem:[#allocation2 + $0x258] sm:$0xff]
    %v491 = vld [vmem:[#allocation2 + $0x260] sm:$0xff]
    %v492 = vld [vmem:[#allocation2 + $0x268] sm:$0xff]
    %v493 = vld [vmem:[#allocation2 + $0x270] sm:$0xff]
    %v494 = vld [vmem:[#allocation2 + $0x278] sm:$0xff]
    %v495 = vld [vmem:[#allocation2 + $0x280] sm:$0xff]
    %v496 = vld [vmem:[#allocation2 + $0x288] sm:$0xff]
    %v497 = vld [vmem:[#allocation2 + $0x290] sm:$0xff]
    %v498 = vld [vmem:[#allocation2 + $0x298] sm:$0xff]
    %v499 = vld [vmem:[#allocation2 + $0x2a0] sm:$0xff]
    %v500 = vld [vmem:[#allocation2 + $0x2a8] sm:$0xff]
    %v501 = vld [vmem:[#allocation2 + $0x2b0] sm:$0xff]
    %v502 = vld [vmem:[#allocation2 + $0x2b8] sm:$0xff]
    %v503 = vld [vmem:[#allocation2 + $0x2c0] sm:$0xff]
    %v504 = vld [vmem:[#allocation2 + $0x2c8] sm:$0xff]
    %v505 = vld [vmem:[#allocation2 + $0x2d0] sm:$0xff]
    %v506 = vld [vmem:[#allocation2 + $0x2d8] sm:$0xff]
    %v507 = vld [vmem:[#allocation2 + $0x2e0] sm:$0xff]
    %v508 = vld [vmem:[#allocation2 + $0x2e8] sm:$0xff]
    %v509 = vld [vmem:[#allocation2 + $0x2f0] sm:$0xff]
    %v510 = vld [vmem:[#allocation2 + $0x2f8] sm:$0xff]
    %v511 = vld [vmem:[#allocation2 + $0x300] sm:$0xff]
    %v512 = vld [vmem:[#allocation2 + $0x308] sm:$0xff]
    %513 = vmatprep.subr.mxu0 0.0
    %514 = vmatpush1.xpose.msra.mxu0 %v511
    %515 = vmatprep.subr.mxu0 0.0
    %516 = vmatpush1.xpose.msra.mxu0 %v510
    %517 = vmatprep.subr.mxu0 0.0
    %518 = vmatpush1.xpose.msra.mxu0 %v509
    %519 = vmatprep.subr.mxu0 0.0
    %520 = vmatpush1.xpose.msra.mxu0 %v508
    %521 = vmatprep.subr.mxu0 0.0
    %522 = vmatpush1.xpose.msra.mxu0 %v507
    %523 = vmatprep.subr.mxu0 0.0
    %524 = vmatpush1.xpose.msra.mxu0 %v506
    %525 = vmatprep.subr.mxu0 0.0
    %526 = vmatpush1.xpose.msra.mxu0 %v505
    %527 = vmatprep.subr.mxu0 0.0
    %528 = vmatpush1.xpose.msra.mxu0 %v504
    %529 = vmatprep.subr.mxu0 0.0
    %530 = vmatpush1.xpose.msra.mxu0 %v503
    %531 = vmatprep.subr.mxu0 0.0
    %532 = vmatpush1.xpose.msra.mxu0 %v502
    %533 = vmatprep.subr.mxu0 0.0
    %534 = vmatpush1.xpose.msra.mxu0 %v501
    %535 = vmatprep.subr.mxu0 0.0
    %536 = vmatpush1.xpose.msra.mxu0 %v500
    %537 = vmatprep.subr.mxu0 0.0
    %538 = vmatpush1.xpose.msra.mxu0 %v499
    %539 = vmatprep.subr.mxu0 0.0
    %540 = vmatpush1.xpose.msra.mxu0 %v498
    %541 = vmatprep.subr.mxu0 0.0
    %542 = vmatpush1.xpose.msra.mxu0 %v497
    %543 = vmatprep.subr.mxu0 0.0
    %544 = vmatpush1.xpose.msra.mxu0 %v496
    %545 = vmatprep.subr.mxu0 0.0
    %546 = vmatpush2.xpose.msra.mxu0 0.0
    %547 = vmatprep.subr.mxu0 0.0
    %548 = vmatpush2.xpose.msra.mxu0 0.0
    %549 = vmatprep.subr.mxu0 0.0
    %550 = vmatpush2.xpose.msra.mxu0 0.0
    %551 = vmatprep.subr.mxu0 0.0
    %552 = vmatpush2.xpose.msra.mxu0 0.0
    %553 = vmatprep.subr.mxu0 0.0
    %554 = vmatpush2.xpose.msra.mxu0 0.0
    %555 = vmatprep.subr.mxu0 0.0
    %556 = vmatpush2.xpose.msra.mxu0 0.0
    %557 = vmatprep.subr.mxu0 0.0
    %558 = vmatpush2.xpose.msra.mxu0 0.0
    %559 = vmatprep.subr.mxu0 0.0
    %560 = vmatpush2.xpose.msra.mxu0 0.0
    %561 = vmatprep.subr.mxu0 0.0
    %562 = vmatpush2.xpose.msra.mxu0 0.0
    %563 = vmatprep.subr.mxu0 0.0
    %564 = vmatpush2.xpose.msra.mxu0 0.0
    %565 = vmatprep.subr.mxu0 0.0
    %566 = vmatpush2.xpose.msra.mxu0 0.0
    %567 = vmatprep.subr.mxu0 0.0
    %568 = vmatpush2.xpose.msra.mxu0 0.0
    %569 = vmatprep.subr.mxu0 0.0
    %570 = vmatpush2.xpose.msra.mxu0 0.0
    %571 = vmatprep.subr.mxu0 0.0
    %572 = vmatpush2.xpose.msra.mxu0 0.0
    %573 = vmatprep.subr.mxu0 0.0
    %574 = vmatpush2.xpose.msra.mxu0 0.0
    %575 = vmatprep.subr.mxu0 0.0
    %576 = vmatpush2.xpose.msra.mxu0 0.0
    %577 = vmatprep.mubr.f32.mxu0 0.0
    %578 = vmatmul.mubr.f32.gmra.mxu0 %v480
    %v579 = vpop.f32.mrf.mxu0
    %v580 = vadd.f32 0.0, %v579
    %v581 = vpop.f32.mrf.mxu0
    %582 = vmatprep.mubr.f32.mxu0 0.0
    %583 = vmatmul.mubr.f32.gmra.mxu0 %v481
    %v584 = vpop.f32.mrf.mxu0
    %v585 = vadd.f32 0.0, %v584
    %v586 = vpop.f32.mrf.mxu0
    %587 = vmatprep.mubr.f32.mxu0 0.0
    %588 = vmatmul.mubr.f32.gmra.mxu0 %v482
    %v589 = vpop.f32.mrf.mxu0
    %v590 = vadd.f32 0.0, %v589
    %v591 = vpop.f32.mrf.mxu0
    %592 = vmatprep.mubr.f32.mxu0 0.0
    %593 = vmatmul.mubr.f32.gmra.mxu0 %v483
    %v594 = vpop.f32.mrf.mxu0
    %v595 = vadd.f32 0.0, %v594
    %v596 = vpop.f32.mrf.mxu0
    %597 = vmatprep.mubr.f32.mxu0 0.0
    %598 = vmatmul.mubr.f32.gmra.mxu0 %v484
    %v599 = vpop.f32.mrf.mxu0
    %v600 = vadd.f32 0.0, %v599
    %v601 = vpop.f32.mrf.mxu0
    %602 = vmatprep.mubr.f32.mxu0 0.0
    %603 = vmatmul.mubr.f32.gmra.mxu0 %v485
    %v604 = vpop.f32.mrf.mxu0
    %v605 = vadd.f32 0.0, %v604
    %v606 = vpop.f32.mrf.mxu0
    %607 = vmatprep.mubr.f32.mxu0 0.0
    %608 = vmatmul.mubr.f32.gmra.mxu0 %v486
    %v609 = vpop.f32.mrf.mxu0
    %v610 = vadd.f32 0.0, %v609
    %v611 = vpop.f32.mrf.mxu0
    %612 = vmatprep.mubr.f32.mxu0 0.0
    %613 = vmatmul.mubr.f32.gmra.mxu0 %v487
    %v614 = vpop.f32.mrf.mxu0
    %v615 = vadd.f32 0.0, %v614
    %v616 = vpop.f32.mrf.mxu0
    %617 = vmatprep.mubr.f32.mxu0 0.0
    %618 = vmatmul.mubr.f32.gmra.mxu0 %v488
    %v619 = vpop.f32.mrf.mxu0
    %v620 = vadd.f32 0.0, %v619
    %v621 = vpop.f32.mrf.mxu0
    %622 = vmatprep.mubr.f32.mxu0 0.0
    %623 = vmatmul.mubr.f32.gmra.mxu0 %v489
    %v624 = vpop.f32.mrf.mxu0
    %v625 = vadd.f32 0.0, %v624
    %v626 = vpop.f32.mrf.mxu0
    %627 = vmatprep.mubr.f32.mxu0 0.0
    %628 = vmatmul.mubr.f32.gmra.mxu0 %v490
    %v629 = vpop.f32.mrf.mxu0
    %v630 = vadd.f32 0.0, %v629
    %v631 = vpop.f32.mrf.mxu0
    %632 = vmatprep.mubr.f32.mxu0 0.0
    %633 = vmatmul.mubr.f32.gmra.mxu0 %v491
    %v634 = vpop.f32.mrf.mxu0
    %v635 = vadd.f32 0.0, %v634
    %v636 = vpop.f32.mrf.mxu0
    %637 = vmatprep.mubr.f32.mxu0 0.0
    %638 = vmatmul.mubr.f32.gmra.mxu0 %v492
    %v639 = vpop.f32.mrf.mxu0
    %v640 = vadd.f32 0.0, %v639
    %v641 = vpop.f32.mrf.mxu0
    %642 = vmatprep.mubr.f32.mxu0 0.0
    %643 = vmatmul.mubr.f32.gmra.mxu0 %v493
    %v644 = vpop.f32.mrf.mxu0
    %v645 = vadd.f32 0.0, %v644
    %v646 = vpop.f32.mrf.mxu0
    %647 = vmatprep.mubr.f32.mxu0 0.0
    %648 = vmatmul.mubr.f32.gmra.mxu0 %v494
    %v649 = vpop.f32.mrf.mxu0
    %v650 = vadd.f32 0.0, %v649
    %v651 = vpop.f32.mrf.mxu0
    %652 = vmatprep.mubr.f32.mxu0 0.0
    %653 = vmatmul.mubr.f32.gmra.mxu0 %v495
    %v654 = vpop.f32.mrf.mxu0
    %v655 = vadd.f32 0.0, %v654
    %v656 = vpop.f32.mrf.mxu0
    %657 = vdwg.mxu0
    %v658 = vsub.f32 1.0, %v580
    %v659 = vsub.f32 1.0, %v585
    %v660 = vsub.f32 1.0, %v590
    %v661 = vsub.f32 1.0, %v595
    %v662 = vsub.f32 1.0, %v600
    %v663 = vsub.f32 1.0, %v605
    %v664 = vsub.f32 1.0, %v610
    %v665 = vsub.f32 1.0, %v615
    %v666 = vsub.f32 1.0, %v620
    %v667 = vsub.f32 1.0, %v625
    %v668 = vsub.f32 1.0, %v630
    %v669 = vsub.f32 1.0, %v635
    %v670 = vsub.f32 1.0, %v640
    %v671 = vsub.f32 1.0, %v645
    %v672 = vsub.f32 1.0, %v650
    %v673 = vsub.f32 1.0, %v655
    %v674 = vmax.f32 %v658, 0.0
    %v675 = vmax.f32 %v659, 0.0
    %v676 = vmax.f32 %v660, 0.0
    %v677 = vmax.f32 %v661, 0.0
    %v678 = vmax.f32 %v662, 0.0
    %v679 = vmax.f32 %v663, 0.0
    %v680 = vmax.f32 %v664, 0.0
    %v681 = vmax.f32 %v665, 0.0
    %v682 = vmax.f32 %v666, 0.0
    %v683 = vmax.f32 %v667, 0.0
    %v684 = vmax.f32 %v668, 0.0
    %v685 = vmax.f32 %v669, 0.0
    %v686 = vmax.f32 %v670, 0.0
    %v687 = vmax.f32 %v671, 0.0
    %v688 = vmax.f32 %v672, 0.0
    %v689 = vmax.f32 %v673, 0.0
    %v690 = vmul.f32 %v674, %v674
    %v691 = vmul.f32 %v675, %v675
    %v692 = vmul.f32 %v676, %v676
    %v693 = vmul.f32 %v677, %v677
    %v694 = vmul.f32 %v678, %v678
    %v695 = vmul.f32 %v679, %v679
    %v696 = vmul.f32 %v680, %v680
    %v697 = vmul.f32 %v681, %v681
    %v698 = vmul.f32 %v682, %v682
    %v699 = vmul.f32 %v683, %v683
    %v700 = vmul.f32 %v684, %v684
    %v701 = vmul.f32 %v685, %v685
    %v702 = vmul.f32 %v686, %v686
    %v703 = vmul.f32 %v687, %v687
    %v704 = vmul.f32 %v688, %v688
    %v705 = vmul.f32 %v689, %v689
    %v706 = vadd.f32 %v690, %v691
    %v707 = vadd.f32 %v706, %v692
    %v708 = vadd.f32 %v707, %v693
    %v709 = vadd.f32 %v708, %v694
    %v710 = vadd.f32 %v709, %v695
    %v711 = vadd.f32 %v710, %v696
    %v712 = vadd.f32 %v711, %v697
    %v713 = vadd.f32 %v712, %v698
    %v714 = vadd.f32 %v713, %v699
    %v715 = vadd.f32 %v714, %v700
    %v716 = vadd.f32 %v715, %v701
    %v717 = vadd.f32 %v716, %v702
    %v718 = vadd.f32 %v717, %v703
    %v719 = vadd.f32 %v718, %v704
    %v720 = vadd.f32 %v719, %v705
    %721 = vadd.xlane.f32.xlu0 %v720
    %v722 = vpop.xlane.xlu0 %721
    %v723 = vrot.slane %v722, 4
    %v724 = vadd.f32 %v722, %v723
    %v725 = vrot.slane %v724, 2
    %v726 = vadd.f32 %v724, %v725
    %v727 = vrot.slane %v726, 1
    %v728 = vadd.f32 %v726, %v727
    %s729 = vtos %v728
    %s730 = smul.f32 %s729, 0.006
    %s731 = smul.f32 %s730, 0.0009765625
    %s732 = sadd.f32 %s356, %s731
    %v733 = vmul.f32 %v464, %v464
    %v734 = vmul.f32 %v465, %v465
    %v735 = vmul.f32 %v466, %v466
    %v736 = vmul.f32 %v467, %v467
    %v737 = vmul.f32 %v468, %v468
    %v738 = vmul.f32 %v469, %v469
    %v739 = vmul.f32 %v470, %v470
    %v740 = vmul.f32 %v471, %v471
    %v741 = vmul.f32 %v472, %v472
    %v742 = vmul.f32 %v473, %v473
    %v743 = vmul.f32 %v474, %v474
    %v744 = vmul.f32 %v475, %v475
    %v745 = vmul.f32 %v476, %v476
    %v746 = vmul.f32 %v477, %v477
    %v747 = vmul.f32 %v478, %v478
    %v748 = vmul.f32 %v479, %v479
    %v749 = vadd.f32 %v733, %v734
    %v750 = vadd.f32 %v749, %v735
    %v751 = vadd.f32 %v750, %v736
    %v752 = vadd.f32 %v751, %v737
    %v753 = vadd.f32 %v752, %v738
    %v754 = vadd.f32 %v753, %v739
    %v755 = vadd.f32 %v754, %v740
    %v756 = vadd.f32 %v755, %v741
    %v757 = vadd.f32 %v756, %v742
    %v758 = vadd.f32 %v757, %v743
    %v759 = vadd.f32 %v758, %v744
    %v760 = vadd.f32 %v759, %v745
    %v761 = vadd.f32 %v760, %v746
    %v762 = vadd.f32 %v761, %v747
    %v763 = vadd.f32 %v762, %v748
    %764 = vadd.xlane.f32.xlu0 %v763
    %v765 = vpop.xlane.xlu0 %764
    %v766 = vrot.slane %v765, 4
    %v767 = vadd.f32 %v765, %v766
    %v768 = vrot.slane %v767, 2
    %v769 = vadd.f32 %v767, %v768
    %v770 = vrot.slane %v769, 1
    %v771 = vadd.f32 %v769, %v770
    %s772 = vtos %v771
    %s773 = smul.f32 %s772, 20.0
    %s774 = smul.f32 %s773, 0.0009765625
    %s775 = sadd.f32 %s732, %s774
    %v776 = vmul.f32 %v464, %v674
    %v777 = vmul.f32 %v465, %v675
    %v778 = vmul.f32 %v466, %v676
    %v779 = vmul.f32 %v467, %v677
    %v780 = vmul.f32 %v468, %v678
    %v781 = vmul.f32 %v469, %v679
    %v782 = vmul.f32 %v470, %v680
    %v783 = vmul.f32 %v471, %v681
    %v784 = vmul.f32 %v472, %v682
    %v785 = vmul.f32 %v473, %v683
    %v786 = vmul.f32 %v474, %v684
    %v787 = vmul.f32 %v475, %v685
    %v788 = vmul.f32 %v476, %v686
    %v789 = vmul.f32 %v477, %v687
    %v790 = vmul.f32 %v478, %v688
    %v791 = vmul.f32 %v479, %v689
    %v792 = vlaneseq
    %v793 = vshrl.u32 %v792, 7
    %v794 = vsub.s32 0, %v793
    %v795 = vrot.slane %v512, %v794
    %796 = vmatprep.subr.mxu0 0.0
    %797 = vmatpush1.msra.mxu0 %v791
    %798 = vmatprep.subr.mxu0 0.0
    %799 = vmatpush1.msra.mxu0 %v790
    %800 = vmatprep.subr.mxu0 0.0
    %801 = vmatpush1.msra.mxu0 %v789
    %802 = vmatprep.subr.mxu0 0.0
    %803 = vmatpush1.msra.mxu0 %v788
    %804 = vmatprep.subr.mxu0 0.0
    %805 = vmatpush1.msra.mxu0 %v787
    %806 = vmatprep.subr.mxu0 0.0
    %807 = vmatpush1.msra.mxu0 %v786
    %808 = vmatprep.subr.mxu0 0.0
    %809 = vmatpush1.msra.mxu0 %v785
    %810 = vmatprep.subr.mxu0 0.0
    %811 = vmatpush1.msra.mxu0 %v784
    %812 = vmatprep.subr.mxu0 0.0
    %813 = vmatpush1.msra.mxu0 %v783
    %814 = vmatprep.subr.mxu0 0.0
    %815 = vmatpush1.msra.mxu0 %v782
    %816 = vmatprep.subr.mxu0 0.0
    %817 = vmatpush1.msra.mxu0 %v781
    %818 = vmatprep.subr.mxu0 0.0
    %819 = vmatpush1.msra.mxu0 %v780
    %820 = vmatprep.subr.mxu0 0.0
    %821 = vmatpush1.msra.mxu0 %v779
    %822 = vmatprep.subr.mxu0 0.0
    %823 = vmatpush1.msra.mxu0 %v778
    %824 = vmatprep.subr.mxu0 0.0
    %825 = vmatpush1.msra.mxu0 %v777
    %826 = vmatprep.subr.mxu0 0.0
    %827 = vmatpush1.msra.mxu0 %v776
    %828 = vmatprep.subr.mxu0 0.0
    %829 = vmatpush2.msra.mxu0 0.0
    %830 = vmatprep.subr.mxu0 0.0
    %831 = vmatpush2.msra.mxu0 0.0
    %832 = vmatprep.subr.mxu0 0.0
    %833 = vmatpush2.msra.mxu0 0.0
    %834 = vmatprep.subr.mxu0 0.0
    %835 = vmatpush2.msra.mxu0 0.0
    %836 = vmatprep.subr.mxu0 0.0
    %837 = vmatpush2.msra.mxu0 0.0
    %838 = vmatprep.subr.mxu0 0.0
    %839 = vmatpush2.msra.mxu0 0.0
    %840 = vmatprep.subr.mxu0 0.0
    %841 = vmatpush2.msra.mxu0 0.0
    %842 = vmatprep.subr.mxu0 0.0
    %843 = vmatpush2.msra.mxu0 0.0
    %844 = vmatprep.subr.mxu0 0.0
    %845 = vmatpush2.msra.mxu0 0.0
    %846 = vmatprep.subr.mxu0 0.0
    %847 = vmatpush2.msra.mxu0 0.0
    %848 = vmatprep.subr.mxu0 0.0
    %849 = vmatpush2.msra.mxu0 0.0
    %850 = vmatprep.subr.mxu0 0.0
    %851 = vmatpush2.msra.mxu0 0.0
    %852 = vmatprep.subr.mxu0 0.0
    %853 = vmatpush2.msra.mxu0 0.0
    %854 = vmatprep.subr.mxu0 0.0
    %855 = vmatpush2.msra.mxu0 0.0
    %856 = vmatprep.subr.mxu0 0.0
    %857 = vmatpush2.msra.mxu0 0.0
    %858 = vmatprep.subr.mxu0 0.0
    %859 = vmatpush2.msra.mxu0 0.0
    %860 = vmatprep.mubr.f32.mxu0 0.0
    %861 = vmatmul.mubr.f32.gmra.mxu0 %v461
    %v862 = vpop.f32.mrf.mxu0
    %v863 = vadd.f32 %v795, %v862
    %v864 = vpop.f32.mrf.mxu0
    %865 = vmatprep.mubr.f32.mxu0 0.0
    %866 = vmatmul.mubr.f32.gmra.mxu0 %v463
    %v867 = vpop.f32.mrf.mxu0
    %v868 = vadd.f32 %v795, %v867
    %v869 = vpop.f32.mrf.mxu0
    %870 = vdwg.mxu0
    %v871 = vxor.u32 %v863, 2147483648
    %v872 = vxor.u32 %v868, 2147483648
    %v873 = vmul.f32 %v871, 1.442695
    %v874 = vpow.pop %v873
    %v875 = vmul.f32 %v872, 1.442695
    %v876 = vpow.pop %v875
    %v877 = vadd.f32 %v874, 1.0
    %v878 = vadd.f32 %v876, 1.0
    %v879 = vrcp.pop %v877
    %v880 = vmul.f32 1.0, %v879
    %v881 = vrcp.pop %v878
    %v882 = vmul.f32 1.0, %v881
    %v883 = vld [vmem:[#allocation2 + $0x310] sm:$0xff]
    %v884 = vld [vmem:[#allocation2 + $0x318] sm:$0xff]
    %v885 = vld [vmem:[#allocation2 + $0x320] sm:$0xff]
    %v886 = vld [vmem:[#allocation2 + $0x328] sm:$0xff]
    %v887 = vld [vmem:[#allocation2 + $0x330] sm:$0xff]
    %v888 = vld [vmem:[#allocation2 + $0x338] sm:$0xff]
    %v889 = vld [vmem:[#allocation2 + $0x340] sm:$0xff]
    %v890 = vld [vmem:[#allocation2 + $0x348] sm:$0xff]
    %v891 = vld [vmem:[#allocation2 + $0x350] sm:$0xff]
    %v892 = vld [vmem:[#allocation2 + $0x358] sm:$0xff]
    %v893 = vld [vmem:[#allocation2 + $0x360] sm:$0xff]
    %v894 = vld [vmem:[#allocation2 + $0x368] sm:$0xff]
    %v895 = vld [vmem:[#allocation2 + $0x370] sm:$0xff]
    %v896 = vld [vmem:[#allocation2 + $0x378] sm:$0xff]
    %v897 = vld [vmem:[#allocation2 + $0x380] sm:$0xff]
    %v898 = vld [vmem:[#allocation2 + $0x388] sm:$0xff]
    %v899 = vld [vmem:[#allocation2 + $0x390] sm:$0xff]
    %v900 = vld [vmem:[#allocation2 + $0x398] sm:$0xff]
    %v901 = vld [vmem:[#allocation2 + $0x3a0] sm:$0xff]
    %v902 = vld [vmem:[#allocation2 + $0x3a8] sm:$0xff]
    %v903 = vld [vmem:[#allocation2 + $0x3b0] sm:$0xff]
    %v904 = vld [vmem:[#allocation2 + $0x3b8] sm:$0xff]
    %v905 = vld [vmem:[#allocation2 + $0x3c0] sm:$0xff]
    %v906 = vld [vmem:[#allocation2 + $0x3c8] sm:$0xff]
    %v907 = vld [vmem:[#allocation2 + $0x3d0] sm:$0xff]
    %v908 = vld [vmem:[#allocation2 + $0x3d8] sm:$0xff]
    %v909 = vld [vmem:[#allocation2 + $0x3e0] sm:$0xff]
    %v910 = vld [vmem:[#allocation2 + $0x3e8] sm:$0xff]
    %v911 = vld [vmem:[#allocation2 + $0x3f0] sm:$0xff]
    %v912 = vld [vmem:[#allocation2 + $0x3f8] sm:$0xff]
    %v913 = vld [vmem:[#allocation2 + $0x400] sm:$0xff]
    %v914 = vld [vmem:[#allocation2 + $0x408] sm:$0xff]
    %v915 = vld [vmem:[#allocation2 + $0x410] sm:$0xff]
    %v916 = vld [vmem:[#allocation2 + $0x418] sm:$0xff]
    %v917 = vld [vmem:[#allocation2 + $0x420] sm:$0xff]
    %v918 = vld [vmem:[#allocation2 + $0x428] sm:$0xff]
    %v919 = vld [vmem:[#allocation2 + $0x430] sm:$0xff]
    %v920 = vld [vmem:[#allocation2 + $0x438] sm:$0xff]
    %v921 = vld [vmem:[#allocation2 + $0x440] sm:$0xff]
    %v922 = vld [vmem:[#allocation2 + $0x448] sm:$0xff]
    %v923 = vld [vmem:[#allocation2 + $0x450] sm:$0xff]
    %v924 = vld [vmem:[#allocation2 + $0x458] sm:$0xff]
    %v925 = vld [vmem:[#allocation2 + $0x460] sm:$0xff]
    %v926 = vld [vmem:[#allocation2 + $0x468] sm:$0xff]
    %v927 = vld [vmem:[#allocation2 + $0x470] sm:$0xff]
    %v928 = vld [vmem:[#allocation2 + $0x478] sm:$0xff]
    %v929 = vld [vmem:[#allocation2 + $0x480] sm:$0xff]
    %v930 = vld [vmem:[#allocation2 + $0x488] sm:$0xff]
    %v931 = vld [vmem:[#allocation2 + $0x490] sm:$0xff]
    %932 = vmatprep.subr.mxu0 0.0
    %933 = vmatpush1.xpose.msra.mxu0 %v930
    %934 = vmatprep.subr.mxu0 0.0
    %935 = vmatpush1.xpose.msra.mxu0 %v929
    %936 = vmatprep.subr.mxu0 0.0
    %937 = vmatpush1.xpose.msra.mxu0 %v928
    %938 = vmatprep.subr.mxu0 0.0
    %939 = vmatpush1.xpose.msra.mxu0 %v927
    %940 = vmatprep.subr.mxu0 0.0
    %941 = vmatpush1.xpose.msra.mxu0 %v926
    %942 = vmatprep.subr.mxu0 0.0
    %943 = vmatpush1.xpose.msra.mxu0 %v925
    %944 = vmatprep.subr.mxu0 0.0
    %945 = vmatpush1.xpose.msra.mxu0 %v924
    %946 = vmatprep.subr.mxu0 0.0
    %947 = vmatpush1.xpose.msra.mxu0 %v923
    %948 = vmatprep.subr.mxu0 0.0
    %949 = vmatpush1.xpose.msra.mxu0 %v922
    %950 = vmatprep.subr.mxu0 0.0
    %951 = vmatpush1.xpose.msra.mxu0 %v921
    %952 = vmatprep.subr.mxu0 0.0
    %953 = vmatpush1.xpose.msra.mxu0 %v920
    %954 = vmatprep.subr.mxu0 0.0
    %955 = vmatpush1.xpose.msra.mxu0 %v919
    %956 = vmatprep.subr.mxu0 0.0
    %957 = vmatpush1.xpose.msra.mxu0 %v918
    %958 = vmatprep.subr.mxu0 0.0
    %959 = vmatpush1.xpose.msra.mxu0 %v917
    %960 = vmatprep.subr.mxu0 0.0
    %961 = vmatpush1.xpose.msra.mxu0 %v916
    %962 = vmatprep.subr.mxu0 0.0
    %963 = vmatpush1.xpose.msra.mxu0 %v915
    %964 = vmatprep.subr.mxu0 0.0
    %965 = vmatpush2.xpose.msra.mxu0 0.0
    %966 = vmatprep.subr.mxu0 0.0
    %967 = vmatpush2.xpose.msra.mxu0 0.0
    %968 = vmatprep.subr.mxu0 0.0
    %969 = vmatpush2.xpose.msra.mxu0 0.0
    %970 = vmatprep.subr.mxu0 0.0
    %971 = vmatpush2.xpose.msra.mxu0 0.0
    %972 = vmatprep.subr.mxu0 0.0
    %973 = vmatpush2.xpose.msra.mxu0 0.0
    %974 = vmatprep.subr.mxu0 0.0
    %975 = vmatpush2.xpose.msra.mxu0 0.0
    %976 = vmatprep.subr.mxu0 0.0
    %977 = vmatpush2.xpose.msra.mxu0 0.0
    %978 = vmatprep.subr.mxu0 0.0
    %979 = vmatpush2.xpose.msra.mxu0 0.0
    %980 = vmatprep.subr.mxu0 0.0
    %981 = vmatpush2.xpose.msra.mxu0 0.0
    %982 = vmatprep.subr.mxu0 0.0
    %983 = vmatpush2.xpose.msra.mxu0 0.0
    %984 = vmatprep.subr.mxu0 0.0
    %985 = vmatpush2.xpose.msra.mxu0 0.0
    %986 = vmatprep.subr.mxu0 0.0
    %987 = vmatpush2.xpose.msra.mxu0 0.0
    %988 = vmatprep.subr.mxu0 0.0
    %989 = vmatpush2.xpose.msra.mxu0 0.0
    %990 = vmatprep.subr.mxu0 0.0
    %991 = vmatpush2.xpose.msra.mxu0 0.0
    %992 = vmatprep.subr.mxu0 0.0
    %993 = vmatpush2.xpose.msra.mxu0 0.0
    %994 = vmatprep.subr.mxu0 0.0
    %995 = vmatpush2.xpose.msra.mxu0 0.0
    %996 = vmatprep.mubr.f32.mxu0 0.0
    %997 = vmatmul.mubr.f32.gmra.mxu0 %v899
    %v998 = vpop.f32.mrf.mxu0
    %v999 = vadd.f32 0.0, %v998
    %v1000 = vpop.f32.mrf.mxu0
    %1001 = vmatprep.mubr.f32.mxu0 0.0
    %1002 = vmatmul.mubr.f32.gmra.mxu0 %v900
    %v1003 = vpop.f32.mrf.mxu0
    %v1004 = vadd.f32 0.0, %v1003
    %v1005 = vpop.f32.mrf.mxu0
    %1006 = vmatprep.mubr.f32.mxu0 0.0
    %1007 = vmatmul.mubr.f32.gmra.mxu0 %v901
    %v1008 = vpop.f32.mrf.mxu0
    %v1009 = vadd.f32 0.0, %v1008
    %v1010 = vpop.f32.mrf.mxu0
    %1011 = vmatprep.mubr.f32.mxu0 0.0
    %1012 = vmatmul.mubr.f32.gmra.mxu0 %v902
    %v1013 = vpop.f32.mrf.mxu0
    %v1014 = vadd.f32 0.0, %v1013
    %v1015 = vpop.f32.mrf.mxu0
    %1016 = vmatprep.mubr.f32.mxu0 0.0
    %1017 = vmatmul.mubr.f32.gmra.mxu0 %v903
    %v1018 = vpop.f32.mrf.mxu0
    %v1019 = vadd.f32 0.0, %v1018
    %v1020 = vpop.f32.mrf.mxu0
    %1021 = vmatprep.mubr.f32.mxu0 0.0
    %1022 = vmatmul.mubr.f32.gmra.mxu0 %v904
    %v1023 = vpop.f32.mrf.mxu0
    %v1024 = vadd.f32 0.0, %v1023
    %v1025 = vpop.f32.mrf.mxu0
    %1026 = vmatprep.mubr.f32.mxu0 0.0
    %1027 = vmatmul.mubr.f32.gmra.mxu0 %v905
    %v1028 = vpop.f32.mrf.mxu0
    %v1029 = vadd.f32 0.0, %v1028
    %v1030 = vpop.f32.mrf.mxu0
    %1031 = vmatprep.mubr.f32.mxu0 0.0
    %1032 = vmatmul.mubr.f32.gmra.mxu0 %v906
    %v1033 = vpop.f32.mrf.mxu0
    %v1034 = vadd.f32 0.0, %v1033
    %v1035 = vpop.f32.mrf.mxu0
    %1036 = vmatprep.mubr.f32.mxu0 0.0
    %1037 = vmatmul.mubr.f32.gmra.mxu0 %v907
    %v1038 = vpop.f32.mrf.mxu0
    %v1039 = vadd.f32 0.0, %v1038
    %v1040 = vpop.f32.mrf.mxu0
    %1041 = vmatprep.mubr.f32.mxu0 0.0
    %1042 = vmatmul.mubr.f32.gmra.mxu0 %v908
    %v1043 = vpop.f32.mrf.mxu0
    %v1044 = vadd.f32 0.0, %v1043
    %v1045 = vpop.f32.mrf.mxu0
    %1046 = vmatprep.mubr.f32.mxu0 0.0
    %1047 = vmatmul.mubr.f32.gmra.mxu0 %v909
    %v1048 = vpop.f32.mrf.mxu0
    %v1049 = vadd.f32 0.0, %v1048
    %v1050 = vpop.f32.mrf.mxu0
    %1051 = vmatprep.mubr.f32.mxu0 0.0
    %1052 = vmatmul.mubr.f32.gmra.mxu0 %v910
    %v1053 = vpop.f32.mrf.mxu0
    %v1054 = vadd.f32 0.0, %v1053
    %v1055 = vpop.f32.mrf.mxu0
    %1056 = vmatprep.mubr.f32.mxu0 0.0
    %1057 = vmatmul.mubr.f32.gmra.mxu0 %v911
    %v1058 = vpop.f32.mrf.mxu0
    %v1059 = vadd.f32 0.0, %v1058
    %v1060 = vpop.f32.mrf.mxu0
    %1061 = vmatprep.mubr.f32.mxu0 0.0
    %1062 = vmatmul.mubr.f32.gmra.mxu0 %v912
    %v1063 = vpop.f32.mrf.mxu0
    %v1064 = vadd.f32 0.0, %v1063
    %v1065 = vpop.f32.mrf.mxu0
    %1066 = vmatprep.mubr.f32.mxu0 0.0
    %1067 = vmatmul.mubr.f32.gmra.mxu0 %v913
    %v1068 = vpop.f32.mrf.mxu0
    %v1069 = vadd.f32 0.0, %v1068
    %v1070 = vpop.f32.mrf.mxu0
    %1071 = vmatprep.mubr.f32.mxu0 0.0
    %1072 = vmatmul.mubr.f32.gmra.mxu0 %v914
    %v1073 = vpop.f32.mrf.mxu0
    %v1074 = vadd.f32 0.0, %v1073
    %v1075 = vpop.f32.mrf.mxu0
    %1076 = vdwg.mxu0
    %v1077 = vsub.f32 1.0, %v999
    %v1078 = vsub.f32 1.0, %v1004
    %v1079 = vsub.f32 1.0, %v1009
    %v1080 = vsub.f32 1.0, %v1014
    %v1081 = vsub.f32 1.0, %v1019
    %v1082 = vsub.f32 1.0, %v1024
    %v1083 = vsub.f32 1.0, %v1029
    %v1084 = vsub.f32 1.0, %v1034
    %v1085 = vsub.f32 1.0, %v1039
    %v1086 = vsub.f32 1.0, %v1044
    %v1087 = vsub.f32 1.0, %v1049
    %v1088 = vsub.f32 1.0, %v1054
    %v1089 = vsub.f32 1.0, %v1059
    %v1090 = vsub.f32 1.0, %v1064
    %v1091 = vsub.f32 1.0, %v1069
    %v1092 = vsub.f32 1.0, %v1074
    %v1093 = vmax.f32 %v1077, 0.0
    %v1094 = vmax.f32 %v1078, 0.0
    %v1095 = vmax.f32 %v1079, 0.0
    %v1096 = vmax.f32 %v1080, 0.0
    %v1097 = vmax.f32 %v1081, 0.0
    %v1098 = vmax.f32 %v1082, 0.0
    %v1099 = vmax.f32 %v1083, 0.0
    %v1100 = vmax.f32 %v1084, 0.0
    %v1101 = vmax.f32 %v1085, 0.0
    %v1102 = vmax.f32 %v1086, 0.0
    %v1103 = vmax.f32 %v1087, 0.0
    %v1104 = vmax.f32 %v1088, 0.0
    %v1105 = vmax.f32 %v1089, 0.0
    %v1106 = vmax.f32 %v1090, 0.0
    %v1107 = vmax.f32 %v1091, 0.0
    %v1108 = vmax.f32 %v1092, 0.0
    %v1109 = vmul.f32 %v1093, %v1093
    %v1110 = vmul.f32 %v1094, %v1094
    %v1111 = vmul.f32 %v1095, %v1095
    %v1112 = vmul.f32 %v1096, %v1096
    %v1113 = vmul.f32 %v1097, %v1097
    %v1114 = vmul.f32 %v1098, %v1098
    %v1115 = vmul.f32 %v1099, %v1099
    %v1116 = vmul.f32 %v1100, %v1100
    %v1117 = vmul.f32 %v1101, %v1101
    %v1118 = vmul.f32 %v1102, %v1102
    %v1119 = vmul.f32 %v1103, %v1103
    %v1120 = vmul.f32 %v1104, %v1104
    %v1121 = vmul.f32 %v1105, %v1105
    %v1122 = vmul.f32 %v1106, %v1106
    %v1123 = vmul.f32 %v1107, %v1107
    %v1124 = vmul.f32 %v1108, %v1108
    %v1125 = vadd.f32 %v1109, %v1110
    %v1126 = vadd.f32 %v1125, %v1111
    %v1127 = vadd.f32 %v1126, %v1112
    %v1128 = vadd.f32 %v1127, %v1113
    %v1129 = vadd.f32 %v1128, %v1114
    %v1130 = vadd.f32 %v1129, %v1115
    %v1131 = vadd.f32 %v1130, %v1116
    %v1132 = vadd.f32 %v1131, %v1117
    %v1133 = vadd.f32 %v1132, %v1118
    %v1134 = vadd.f32 %v1133, %v1119
    %v1135 = vadd.f32 %v1134, %v1120
    %v1136 = vadd.f32 %v1135, %v1121
    %v1137 = vadd.f32 %v1136, %v1122
    %v1138 = vadd.f32 %v1137, %v1123
    %v1139 = vadd.f32 %v1138, %v1124
    %1140 = vadd.xlane.f32.xlu0 %v1139
    %v1141 = vpop.xlane.xlu0 %1140
    %v1142 = vrot.slane %v1141, 4
    %v1143 = vadd.f32 %v1141, %v1142
    %v1144 = vrot.slane %v1143, 2
    %v1145 = vadd.f32 %v1143, %v1144
    %v1146 = vrot.slane %v1145, 1
    %v1147 = vadd.f32 %v1145, %v1146
    %s1148 = vtos %v1147
    %s1149 = smul.f32 %s1148, 0.006
    %s1150 = smul.f32 %s1149, 0.0009765625
    %s1151 = sadd.f32 %s775, %s1150
    %v1152 = vmul.f32 %v883, %v883
    %v1153 = vmul.f32 %v884, %v884
    %v1154 = vmul.f32 %v885, %v885
    %v1155 = vmul.f32 %v886, %v886
    %v1156 = vmul.f32 %v887, %v887
    %v1157 = vmul.f32 %v888, %v888
    %v1158 = vmul.f32 %v889, %v889
    %v1159 = vmul.f32 %v890, %v890
    %v1160 = vmul.f32 %v891, %v891
    %v1161 = vmul.f32 %v892, %v892
    %v1162 = vmul.f32 %v893, %v893
    %v1163 = vmul.f32 %v894, %v894
    %v1164 = vmul.f32 %v895, %v895
    %v1165 = vmul.f32 %v896, %v896
    %v1166 = vmul.f32 %v897, %v897
    %v1167 = vmul.f32 %v898, %v898
    %v1168 = vadd.f32 %v1152, %v1153
    %v1169 = vadd.f32 %v1168, %v1154
    %v1170 = vadd.f32 %v1169, %v1155
    %v1171 = vadd.f32 %v1170, %v1156
    %v1172 = vadd.f32 %v1171, %v1157
    %v1173 = vadd.f32 %v1172, %v1158
    %v1174 = vadd.f32 %v1173, %v1159
    %v1175 = vadd.f32 %v1174, %v1160
    %v1176 = vadd.f32 %v1175, %v1161
    %v1177 = vadd.f32 %v1176, %v1162
    %v1178 = vadd.f32 %v1177, %v1163
    %v1179 = vadd.f32 %v1178, %v1164
    %v1180 = vadd.f32 %v1179, %v1165
    %v1181 = vadd.f32 %v1180, %v1166
    %v1182 = vadd.f32 %v1181, %v1167
    %1183 = vadd.xlane.f32.xlu0 %v1182
    %v1184 = vpop.xlane.xlu0 %1183
    %v1185 = vrot.slane %v1184, 4
    %v1186 = vadd.f32 %v1184, %v1185
    %v1187 = vrot.slane %v1186, 2
    %v1188 = vadd.f32 %v1186, %v1187
    %v1189 = vrot.slane %v1188, 1
    %v1190 = vadd.f32 %v1188, %v1189
    %s1191 = vtos %v1190
    %s1192 = smul.f32 %s1191, 20.0
    %s1193 = smul.f32 %s1192, 0.0009765625
    %s1194 = sadd.f32 %s1151, %s1193
    %v1195 = vmul.f32 %v883, %v1093
    %v1196 = vmul.f32 %v884, %v1094
    %v1197 = vmul.f32 %v885, %v1095
    %v1198 = vmul.f32 %v886, %v1096
    %v1199 = vmul.f32 %v887, %v1097
    %v1200 = vmul.f32 %v888, %v1098
    %v1201 = vmul.f32 %v889, %v1099
    %v1202 = vmul.f32 %v890, %v1100
    %v1203 = vmul.f32 %v891, %v1101
    %v1204 = vmul.f32 %v892, %v1102
    %v1205 = vmul.f32 %v893, %v1103
    %v1206 = vmul.f32 %v894, %v1104
    %v1207 = vmul.f32 %v895, %v1105
    %v1208 = vmul.f32 %v896, %v1106
    %v1209 = vmul.f32 %v897, %v1107
    %v1210 = vmul.f32 %v898, %v1108
    %v1211 = vlaneseq
    %v1212 = vshrl.u32 %v1211, 7
    %v1213 = vsub.s32 0, %v1212
    %v1214 = vrot.slane %v931, %v1213
    %1215 = vmatprep.subr.mxu0 0.0
    %1216 = vmatpush1.msra.mxu0 %v1210
    %1217 = vmatprep.subr.mxu0 0.0
    %1218 = vmatpush1.msra.mxu0 %v1209
    %1219 = vmatprep.subr.mxu0 0.0
    %1220 = vmatpush1.msra.mxu0 %v1208
    %1221 = vmatprep.subr.mxu0 0.0
    %1222 = vmatpush1.msra.mxu0 %v1207
    %1223 = vmatprep.subr.mxu0 0.0
    %1224 = vmatpush1.msra.mxu0 %v1206
    %1225 = vmatprep.subr.mxu0 0.0
    %1226 = vmatpush1.msra.mxu0 %v1205
    %1227 = vmatprep.subr.mxu0 0.0
    %1228 = vmatpush1.msra.mxu0 %v1204
    %1229 = vmatprep.subr.mxu0 0.0
    %1230 = vmatpush1.msra.mxu0 %v1203
    %1231 = vmatprep.subr.mxu0 0.0
    %1232 = vmatpush1.msra.mxu0 %v1202
    %1233 = vmatprep.subr.mxu0 0.0
    %1234 = vmatpush1.msra.mxu0 %v1201
    %1235 = vmatprep.subr.mxu0 0.0
    %1236 = vmatpush1.msra.mxu0 %v1200
    %1237 = vmatprep.subr.mxu0 0.0
    %1238 = vmatpush1.msra.mxu0 %v1199
    %1239 = vmatprep.subr.mxu0 0.0
    %1240 = vmatpush1.msra.mxu0 %v1198
    %1241 = vmatprep.subr.mxu0 0.0
    %1242 = vmatpush1.msra.mxu0 %v1197
    %1243 = vmatprep.subr.mxu0 0.0
    %1244 = vmatpush1.msra.mxu0 %v1196
    %1245 = vmatprep.subr.mxu0 0.0
    %1246 = vmatpush1.msra.mxu0 %v1195
    %1247 = vmatprep.subr.mxu0 0.0
    %1248 = vmatpush2.msra.mxu0 0.0
    %1249 = vmatprep.subr.mxu0 0.0
    %1250 = vmatpush2.msra.mxu0 0.0
    %1251 = vmatprep.subr.mxu0 0.0
    %1252 = vmatpush2.msra.mxu0 0.0
    %1253 = vmatprep.subr.mxu0 0.0
    %1254 = vmatpush2.msra.mxu0 0.0
    %1255 = vmatprep.subr.mxu0 0.0
    %1256 = vmatpush2.msra.mxu0 0.0
    %1257 = vmatprep.subr.mxu0 0.0
    %1258 = vmatpush2.msra.mxu0 0.0
    %1259 = vmatprep.subr.mxu0 0.0
    %1260 = vmatpush2.msra.mxu0 0.0
    %1261 = vmatprep.subr.mxu0 0.0
    %1262 = vmatpush2.msra.mxu0 0.0
    %1263 = vmatprep.subr.mxu0 0.0
    %1264 = vmatpush2.msra.mxu0 0.0
    %1265 = vmatprep.subr.mxu0 0.0
    %1266 = vmatpush2.msra.mxu0 0.0
    %1267 = vmatprep.subr.mxu0 0.0
    %1268 = vmatpush2.msra.mxu0 0.0
    %1269 = vmatprep.subr.mxu0 0.0
    %1270 = vmatpush2.msra.mxu0 0.0
    %1271 = vmatprep.subr.mxu0 0.0
    %1272 = vmatpush2.msra.mxu0 0.0
    %1273 = vmatprep.subr.mxu0 0.0
    %1274 = vmatpush2.msra.mxu0 0.0
    %1275 = vmatprep.subr.mxu0 0.0
    %1276 = vmatpush2.msra.mxu0 0.0
    %1277 = vmatprep.subr.mxu0 0.0
    %1278 = vmatpush2.msra.mxu0 0.0
    %1279 = vmatprep.mubr.f32.mxu0 0.0
    %1280 = vmatmul.mubr.f32.gmra.mxu0 %v880
    %v1281 = vpop.f32.mrf.mxu0
    %v1282 = vadd.f32 %v1214, %v1281
    %v1283 = vpop.f32.mrf.mxu0
    %1284 = vmatprep.mubr.f32.mxu0 0.0
    %1285 = vmatmul.mubr.f32.gmra.mxu0 %v882
    %v1286 = vpop.f32.mrf.mxu0
    %v1287 = vadd.f32 %v1214, %v1286
    %v1288 = vpop.f32.mrf.mxu0
    %1289 = vdwg.mxu0
    %1290 = vst [vmem:[#allocation8] sm:$0xff] %v1282
    %1291 = vst [vmem:[#allocation8 + $0x8] sm:$0xff] %v1287
    %s1292 = scalar_lea.smem [#allocation9], 0
    %1293 = sst [smem:[%s1292]] %s1194
    // Predicated region
    $region18: #{tpu_custom_call.1} parent=1 // pred_check
      _
    $region19: #{tpu_custom_call.1} parent=1 // pred_check_branch
      %1295 = sbr.rel (0) target = $region21
    $region20: #{tpu_custom_call.1} parent=1 // pred_region
      %s1297 = ssub.s32 256, 256
      %1298 = vsyncadd [#allocation4], %s1297
      %s1299 = sshll.u32 [#allocation8], 4
      %s1300 = int_to_ptr.vmem [resolvable:$true] %s1299
      %1305 = dma.vmem_to_hbm [thread:$0]  %s1300, 256, %s2, [#allocation4], 128, 128, 8
    $region21: #{tpu_custom_call.1} parent=1 // pred_fallthru
      _
    // Predicated region
    $region22: #{tpu_custom_call.1} parent=1 // pred_check
      _
    $region23: #{tpu_custom_call.1} parent=1 // pred_check_branch
      %1307 = sbr.rel (0) target = $region25
    $region24: #{tpu_custom_call.1} parent=1 // pred_region
      %s1309 = ssub.s32 16, 16
      %1310 = vsyncadd [#allocation5], %s1309
      %1313 = dma.smem_to_hbm [#allocation9], 16, %s3, [#allocation5]
    $region25: #{tpu_custom_call.1} parent=1 // pred_fallthru
      _
    // Predicated region
    $region26: #{tpu_custom_call.1} parent=1 // pred_check
      _
    $region27: #{tpu_custom_call.1} parent=1 // pred_check_branch
      %1315 = sbr.rel (0) target = $region29
    $region28: #{tpu_custom_call.1} parent=1 // pred_region
      %1316 = dma.done [#allocation4], 256
    $region29: #{tpu_custom_call.1} parent=1 // pred_fallthru
      _
    // Predicated region
    $region30: #{tpu_custom_call.1} parent=1 // pred_check
      _
    $region31: #{tpu_custom_call.1} parent=1 // pred_check_branch
      %1318 = sbr.rel (0) target = $region33
    $region32: #{tpu_custom_call.1} parent=1 // pred_region
      %1319 = dma.done [#allocation5], 16
    $region33: #{tpu_custom_call.1} parent=1 // pred_fallthru
      _
    %1320 = sfence
    %1321 = vsyncpa [#allocation3], 1
    %1322 = vsyncpa [#allocation7], 1
    %1323 = vsyncpa [#allocation4], 1
    %1324 = vsyncpa [#allocation5], 1

</llo_original>
